<compile_context>
chip_gen: v7x
topology: tpu7x:2x2x1
jax: 0.10.0
libtpu: 0.0.40
codegen_flags: <defaults>
</compile_context>

<pallas_src>
import functools

import jax
import jax.numpy as jnp
from jax import lax
from jax.experimental import pallas as pl
from jax.experimental.pallas import tpu as pltpu


def _gru_cell_kernel(x_ref, h_ref, mx_ref, mh_ref, mu_ref, b_ref, out_ref, *, H, K):
    """Single grid step: all B images.  rows = B*H (sublanes), lanes = W*C."""
    f32 = jnp.float32
    bf16 = jnp.bfloat16
    M, WCh = out_ref.shape                      # (B*H, W*Ch)
    pad = (K - 1) // 2

    x2 = x_ref[...].astype(f32)                 # (M, W*Cin)
    h2 = h_ref[...].astype(f32)                 # (M, W*Ch)  kept f32 for gate math

    # Row index within each image -> H-border mask ('same' conv zero padding in H).
    row_in_img = lax.broadcasted_iota(jnp.int32, (M, 1), 0) % H

    def shifted(v, dh):
        # shifted(v, dh)[r] = v[r + dh] if r+dh stays inside the same image, else 0.
        if dh == 0:
            return v
        rolled = pltpu.roll(v, shift=(-dh) % M, axis=0)        # XLU, not MXU
        valid = (row_in_img + dh >= 0) & (row_in_img + dh < H)
        return jnp.where(valid, rolled, 0.0)

    def im2col_h(v):
        # (M, L) -> (M, K*L): the K H-shifted copies stacked on the lane axis,
        # block kh holds the (kh - pad) shift, matching the wrapper weight layout.
        return jnp.concatenate([shifted(v, kh - pad) for kh in range(K)], axis=1)

    x_cat = im2col_h(x2).astype(bf16)           # (M, K*W*Cin)
    h_cat = im2col_h(h2).astype(bf16)           # (M, K*W*Ch)

    # Two fused MXU matmuls: x -> Wz|Wr|Wh, h -> Uz|Ur  (bf16 in, f32 accumulate).
    acc_x = jnp.dot(x_cat, mx_ref[...], preferred_element_type=f32)   # (M, 3*WCh)
    acc_h = jnp.dot(h_cat, mh_ref[...], preferred_element_type=f32)   # (M, 2*WCh)
    acc_x = acc_x + b_ref[...].astype(f32)      # biases only on the x-driven convs

    # One EUP launch for both sigmoids on the fused (z|r) slab.
    zr = jax.nn.sigmoid(acc_x[:, :2 * WCh] + acc_h)
    zt = zr[:, :WCh]
    rt = zr[:, WCh:]

    # Third matmul: Uh(rt * h).
    rh_cat = im2col_h(rt * h2).astype(bf16)     # (M, K*W*Ch)
    acc_u = jnp.dot(rh_cat, mu_ref[...], preferred_element_type=f32)  # (M, WCh)

    pre = acc_x[:, 2 * WCh:] + acc_u
    h_hat = jnp.maximum(pre, 0.01 * pre)        # LeakyReLU, PyTorch default slope
    out_ref[...] = ((1.0 - zt) * h_hat + zt * h2).astype(out_ref.dtype)


def _banded_weights(w_list, W, K):
    """Fold W-direction conv taps + gate fusion into banded matrices.

    w_list: list of G HWIO kernels, each (K, K, Cin, Ch) with identical Cin/Ch.
    Returns (K, W*Cin, G*W*Ch) f32 such that, with X laid out as (rows, W*Cin),
      conv_out[r, g*W*Ch + w*Ch + co] = sum_kh (shift_{kh-pad} X) @ M[kh].
    Zero padding in W is absorbed by the band structure of the matrices.
    """
    pad = (K - 1) // 2
    Wcat = jnp.stack([w.astype(jnp.float32) for w in w_list], axis=0)  # (G,K,K,Cin,Ch)
    G, _, _, Cin, Ch = Wcat.shape
    w_in = jnp.arange(W)[:, None]
    w_out = jnp.arange(W)[None, :]
    kw = w_in - w_out + pad                     # (W_in, W_out)
    valid = (kw >= 0) & (kw < K)
    kw_c = jnp.clip(kw, 0, K - 1)
    taps = Wcat[:, :, kw_c, :, :]               # (G, K, W_in, W_out, Cin, Ch)
    taps = jnp.where(valid[None, None, :, :, None, None], taps, 0.0)
    taps = jnp.transpose(taps, (1, 2, 4, 0, 3, 5))  # (K, W_in, Cin, G, W_out, Ch)
    return taps.reshape(K, W * Cin, G * W * Ch)


def _gate_bias(b_list, W):
    """Biases on the fused lane axis: index g*W*Ch + w*Ch + c -> b_g[c]."""
    rows = [jnp.tile(b.astype(jnp.float32).reshape(-1), W) for b in b_list]
    return jnp.concatenate(rows).reshape(1, -1)


def gru_cell_pallas(x, h, params, K):
    """x: (B, H, W, Cin), h: (B, H, W, Ch) NHWC.  Returns new hidden (B, H, W, Ch)."""
    B, H, W, Cin = x.shape
    Ch = h.shape[-1]
    Wz, Wr, Wh, Uz, Ur, Uh, bz, br, bh = params
    bf16 = jnp.bfloat16

    # Banded weights, K H-taps stacked on the contraction axis, pre-cast to bf16.
    mx = _banded_weights([Wz, Wr, Wh], W, K).reshape(K * W * Cin, 3 * W * Ch).astype(bf16)
    mh = _banded_weights([Uz, Ur], W, K).reshape(K * W * Ch, 2 * W * Ch).astype(bf16)
    mu = _banded_weights([Uh], W, K).reshape(K * W * Ch, 1 * W * Ch).astype(bf16)
    bias = _gate_bias([bz, br, bh], W)          # (1, 3*W*Ch) f32

    # Pure row-major reshapes (no jnp.pad) -> lane-dense 2D slabs.
    M = B * H
    x2 = x.reshape(M, W * Cin)
    h2 = h.reshape(M, W * Ch)

    def full(shape):
        return pl.BlockSpec(shape, lambda i: (0,) * len(shape))

    # TODO(synk): for very large B*H, split rows across v7x TensorCores once each
    # core's block reaches >= ~256 rows; at 32 rows a single step is fastest.
    out2 = pl.pallas_call(
        functools.partial(_gru_cell_kernel, H=H, K=K),
        out_shape=jax.ShapeDtypeStruct((M, W * Ch), h.dtype),
        grid=(1,),
        in_specs=[
            full((M, W * Cin)),
            full((M, W * Ch)),
            full(mx.shape),
            full(mh.shape),
            full(mu.shape),
            full(bias.shape),
        ],
        out_specs=full((M, W * Ch)),
        input_output_aliases={1: 0},            # new hidden overwrites old hidden
        compiler_params=pltpu.CompilerParams(dimension_semantics=("arbitrary",)),
    )(x2, h2, mx, mh, mu, bias)
    return out2.reshape(B, H, W, Ch)


def gru_cell_ref(x, h, params):
    """Pure-JAX reference (matches the PyTorch forward, NHWC layout)."""
    Wz, Wr, Wh, Uz, Ur, Uh, bz, br, bh = params
    dn = ("NHWC", "HWIO", "NHWC")
    conv = lambda a, w: lax.conv_general_dilated(
        a, w, (1, 1), "SAME", dimension_numbers=dn,
        precision=lax.Precision.HIGHEST)
    zt = jax.nn.sigmoid(conv(x, Wz) + bz + conv(h, Uz))
    rt = jax.nn.sigmoid(conv(x, Wr) + br + conv(h, Ur))
    pre = conv(x, Wh) + bh + conv(rt * h, Uh)
    h_hat = jnp.where(pre >= 0, pre, 0.01 * pre)
    return (1.0 - zt) * h_hat + zt * h


if __name__ == "__main__":
    B, H, W = 2, 16, 16
    Cin, Ch, K = 4, 8, 3

    key = jax.random.PRNGKey(0)
    keys = jax.random.split(key, 11)
    sx = 1.0 / (K * K * Cin) ** 0.5   # ~ PyTorch Conv2d init bound (fan_in based)
    sh = 1.0 / (K * K * Ch) ** 0.5

    x = jax.random.normal(keys[0], (B, H, W, Cin), jnp.float32)
    h = jax.random.normal(keys[1], (B, H, W, Ch), jnp.float32)

    Wz = jax.random.uniform(keys[2], (K, K, Cin, Ch), jnp.float32, -sx, sx)
    Wr = jax.random.uniform(keys[3], (K, K, Cin, Ch), jnp.float32, -sx, sx)
    Wh = jax.random.uniform(keys[4], (K, K, Cin, Ch), jnp.float32, -sx, sx)
    Uz = jax.random.uniform(keys[5], (K, K, Ch, Ch), jnp.float32, -sh, sh)
    Ur = jax.random.uniform(keys[6], (K, K, Ch, Ch), jnp.float32, -sh, sh)
    Uh = jax.random.uniform(keys[7], (K, K, Ch, Ch), jnp.float32, -sh, sh)
    bz = jax.random.uniform(keys[8], (Ch,), jnp.float32, -sx, sx)
    br = jax.random.uniform(keys[9], (Ch,), jnp.float32, -sx, sx)
    bh = jax.random.uniform(keys[10], (Ch,), jnp.float32, -sx, sx)
    params = (Wz, Wr, Wh, Uz, Ur, Uh, bz, br, bh)

    out = jax.block_until_ready(gru_cell_pallas(x, h, params, K))
    ref = gru_cell_ref(x, h, params)

    assert out.shape == (B, H, W, Ch)
    # Tolerance absorbs bf16 MXU operands (f32 accumulation, f32 gate math);
    # structural/indexing errors would show up as O(0.1+).
    err = float(jnp.max(jnp.abs(out - ref)))
    assert jnp.allclose(out, ref, rtol=2e-2, atol=2e-2), err

    print("KERNEL_OK")
</pallas_src>

<mosaic_0001>
module attributes {stable_mosaic.version = 11 : i64} {
  func.func @_gru_cell_kernel(%arg0: i32, %arg1: memref<32x64xf32, #tpu.memory_space<vmem>>, %arg2: memref<32x128xf32, #tpu.memory_space<vmem>>, %arg3: memref<192x384xbf16, #tpu.memory_space<vmem>>, %arg4: memref<384x256xbf16, #tpu.memory_space<vmem>>, %arg5: memref<384x128xbf16, #tpu.memory_space<vmem>>, %arg6: memref<1x384xf32, #tpu.memory_space<vmem>>, %arg7: memref<32x128xf32, #tpu.memory_space<vmem>>) attributes {dimension_semantics = [#tpu.dimension_semantics<arbitrary>], iteration_bounds = array<i64: 1>, scalar_prefetch = 0 : i64, scratch_operands = 0 : i64, tpu.core_type = #tpu.core_type<tc>, window_params = [{pipeline_mode = #tpu.pipeline_mode<synchronous>, transform_indices = @transform_0, window_bounds = array<i64: 32, 64>}, {pipeline_mode = #tpu.pipeline_mode<synchronous>, transform_indices = @transform_1, window_bounds = array<i64: 32, 128>}, {pipeline_mode = #tpu.pipeline_mode<synchronous>, transform_indices = @transform_2, window_bounds = array<i64: 192, 384>}, {pipeline_mode = #tpu.pipeline_mode<synchronous>, transform_indices = @transform_3, window_bounds = array<i64: 384, 256>}, {pipeline_mode = #tpu.pipeline_mode<synchronous>, transform_indices = @transform_4, window_bounds = array<i64: 384, 128>}, {pipeline_mode = #tpu.pipeline_mode<synchronous>, transform_indices = @transform_5, window_bounds = array<i64: 1, 384>}, {pipeline_mode = #tpu.pipeline_mode<synchronous>, transform_indices = @transform_6, window_bounds = array<i64: 32, 128>}]} {
    %c0 = arith.constant 0 : index
    %c0_0 = arith.constant 0 : index
    %0 = vector.load %arg1[%c0, %c0_0] : memref<32x64xf32, #tpu.memory_space<vmem>>, vector<32x64xf32>
    %c0_1 = arith.constant 0 : index
    %c0_2 = arith.constant 0 : index
    %1 = vector.load %arg2[%c0_1, %c0_2] : memref<32x128xf32, #tpu.memory_space<vmem>>, vector<32x128xf32>
    %2 = tpu.iota {dimensions = array<i32: 0>} : vector<32x1xi32>
    %c16_i32 = arith.constant 16 : i32
    %c0_i32 = arith.constant 0 : i32
    %3 = arith.cmpi eq, %c16_i32, %c0_i32 : i32
    %c1_i32 = arith.constant 1 : i32
    %4 = arith.select %3, %c1_i32, %c16_i32 : i32
    %5 = vector.broadcast %4 : i32 to vector<32x1xi32>
    %6 = arith.remsi %2, %5 : vector<32x1xi32>
    %c0_i32_3 = arith.constant 0 : i32
    %7 = vector.broadcast %c0_i32_3 : i32 to vector<32x1xi32>
    %8 = arith.cmpi ne, %6, %7 : vector<32x1xi32>
    %c0_i32_4 = arith.constant 0 : i32
    %9 = vector.broadcast %c0_i32_4 : i32 to vector<32x1xi32>
    %10 = arith.cmpi slt, %6, %9 : vector<32x1xi32>
    %c0_i32_5 = arith.constant 0 : i32
    %11 = arith.cmpi slt, %4, %c0_i32_5 : i32
    %12 = vector.broadcast %11 : i1 to vector<32x1xi1>
    %13 = vector.broadcast %12 : vector<32x1xi1> to vector<32x1xi1>
    %14 = arith.xori %10, %13 : vector<32x1xi1>
    %15 = arith.andi %14, %8 : vector<32x1xi1>
    %16 = vector.broadcast %4 : i32 to vector<32x1xi32>
    %17 = arith.addi %6, %16 : vector<32x1xi32>
    %18 = arith.select %15, %17, %6 : vector<32x1xi1>, vector<32x1xi32>
    %c1_i32_6 = arith.constant 1 : i32
    %19 = tpu.dynamic_rotate %0 by %c1_i32_6 dim 0 : vector<32x64xf32>, i32 -> vector<32x64xf32>
    %c-1_i32 = arith.constant -1 : i32
    %20 = vector.broadcast %c-1_i32 : i32 to vector<32x1xi32>
    %21 = arith.addi %18, %20 : vector<32x1xi32>
    %c0_i32_7 = arith.constant 0 : i32
    %22 = vector.broadcast %c0_i32_7 : i32 to vector<32x1xi32>
    %23 = arith.cmpi sge, %21, %22 : vector<32x1xi32>
    %c-1_i32_8 = arith.constant -1 : i32
    %24 = vector.broadcast %c-1_i32_8 : i32 to vector<32x1xi32>
    %25 = arith.addi %18, %24 : vector<32x1xi32>
    %c16_i32_9 = arith.constant 16 : i32
    %26 = vector.broadcast %c16_i32_9 : i32 to vector<32x1xi32>
    %27 = arith.cmpi slt, %25, %26 : vector<32x1xi32>
    %28 = arith.andi %23, %27 : vector<32x1xi1>
    %cst = arith.constant 0.000000e+00 : f32
    %29 = vector.shape_cast %28 : vector<32x1xi1> to vector<32x1xi1>
    %30 = vector.broadcast %29 : vector<32x1xi1> to vector<32x64xi1>
    %31 = vector.broadcast %cst : f32 to vector<32x64xf32>
    %32 = arith.select %30, %19, %31 : vector<32x64xi1>, vector<32x64xf32>
    %c31_i32 = arith.constant 31 : i32
    %33 = tpu.dynamic_rotate %0 by %c31_i32 dim 0 : vector<32x64xf32>, i32 -> vector<32x64xf32>
    %c1_i32_10 = arith.constant 1 : i32
    %34 = vector.broadcast %c1_i32_10 : i32 to vector<32x1xi32>
    %35 = arith.addi %18, %34 : vector<32x1xi32>
    %c0_i32_11 = arith.constant 0 : i32
    %36 = vector.broadcast %c0_i32_11 : i32 to vector<32x1xi32>
    %37 = arith.cmpi sge, %35, %36 : vector<32x1xi32>
    %c1_i32_12 = arith.constant 1 : i32
    %38 = vector.broadcast %c1_i32_12 : i32 to vector<32x1xi32>
    %39 = arith.addi %18, %38 : vector<32x1xi32>
    %c16_i32_13 = arith.constant 16 : i32
    %40 = vector.broadcast %c16_i32_13 : i32 to vector<32x1xi32>
    %41 = arith.cmpi slt, %39, %40 : vector<32x1xi32>
    %42 = arith.andi %37, %41 : vector<32x1xi1>
    %cst_14 = arith.constant 0.000000e+00 : f32
    %43 = vector.shape_cast %42 : vector<32x1xi1> to vector<32x1xi1>
    %44 = vector.broadcast %43 : vector<32x1xi1> to vector<32x64xi1>
    %45 = vector.broadcast %cst_14 : f32 to vector<32x64xf32>
    %46 = arith.select %44, %33, %45 : vector<32x64xi1>, vector<32x64xf32>
    %47 = tpu.concatenate %32, %0, %46 in 1 : vector<32x64xf32>, vector<32x64xf32>, vector<32x64xf32> -> vector<32x192xf32>
    %48 = arith.truncf %47 : vector<32x192xf32> to vector<32x192xbf16>
    %c1_i32_15 = arith.constant 1 : i32
    %49 = tpu.dynamic_rotate %1 by %c1_i32_15 dim 0 : vector<32x128xf32>, i32 -> vector<32x128xf32>
    %c-1_i32_16 = arith.constant -1 : i32
    %50 = vector.broadcast %c-1_i32_16 : i32 to vector<32x1xi32>
    %51 = arith.addi %18, %50 : vector<32x1xi32>
    %c0_i32_17 = arith.constant 0 : i32
    %52 = vector.broadcast %c0_i32_17 : i32 to vector<32x1xi32>
    %53 = arith.cmpi sge, %51, %52 : vector<32x1xi32>
    %c-1_i32_18 = arith.constant -1 : i32
    %54 = vector.broadcast %c-1_i32_18 : i32 to vector<32x1xi32>
    %55 = arith.addi %18, %54 : vector<32x1xi32>
    %c16_i32_19 = arith.constant 16 : i32
    %56 = vector.broadcast %c16_i32_19 : i32 to vector<32x1xi32>
    %57 = arith.cmpi slt, %55, %56 : vector<32x1xi32>
    %58 = arith.andi %53, %57 : vector<32x1xi1>
    %cst_20 = arith.constant 0.000000e+00 : f32
    %59 = vector.shape_cast %58 : vector<32x1xi1> to vector<32x1xi1>
    %60 = vector.broadcast %59 : vector<32x1xi1> to vector<32x128xi1>
    %61 = vector.broadcast %cst_20 : f32 to vector<32x128xf32>
    %62 = arith.select %60, %49, %61 : vector<32x128xi1>, vector<32x128xf32>
    %c31_i32_21 = arith.constant 31 : i32
    %63 = tpu.dynamic_rotate %1 by %c31_i32_21 dim 0 : vector<32x128xf32>, i32 -> vector<32x128xf32>
    %c1_i32_22 = arith.constant 1 : i32
    %64 = vector.broadcast %c1_i32_22 : i32 to vector<32x1xi32>
    %65 = arith.addi %18, %64 : vector<32x1xi32>
    %c0_i32_23 = arith.constant 0 : i32
    %66 = vector.broadcast %c0_i32_23 : i32 to vector<32x1xi32>
    %67 = arith.cmpi sge, %65, %66 : vector<32x1xi32>
    %c1_i32_24 = arith.constant 1 : i32
    %68 = vector.broadcast %c1_i32_24 : i32 to vector<32x1xi32>
    %69 = arith.addi %18, %68 : vector<32x1xi32>
    %c16_i32_25 = arith.constant 16 : i32
    %70 = vector.broadcast %c16_i32_25 : i32 to vector<32x1xi32>
    %71 = arith.cmpi slt, %69, %70 : vector<32x1xi32>
    %72 = arith.andi %67, %71 : vector<32x1xi1>
    %cst_26 = arith.constant 0.000000e+00 : f32
    %73 = vector.shape_cast %72 : vector<32x1xi1> to vector<32x1xi1>
    %74 = vector.broadcast %73 : vector<32x1xi1> to vector<32x128xi1>
    %75 = vector.broadcast %cst_26 : f32 to vector<32x128xf32>
    %76 = arith.select %74, %63, %75 : vector<32x128xi1>, vector<32x128xf32>
    %77 = tpu.concatenate %62, %1, %76 in 1 : vector<32x128xf32>, vector<32x128xf32>, vector<32x128xf32> -> vector<32x384xf32>
    %78 = arith.truncf %77 : vector<32x384xf32> to vector<32x384xbf16>
    %c0_27 = arith.constant 0 : index
    %c0_28 = arith.constant 0 : index
    %79 = vector.load %arg3[%c0_27, %c0_28] : memref<192x384xbf16, #tpu.memory_space<vmem>>, vector<192x384xbf16>
    %cst_29 = arith.constant dense<0.000000e+00> : vector<32x384xf32>
    %80 = tpu.matmul %48, %79, %cst_29 {dimension_numbers = #tpu.dot_dimension_numbers<[1], [0], [0], [1], [0, 0, 1, 1], [], []>} : vector<32x192xbf16>, vector<192x384xbf16>, vector<32x384xf32> -> vector<32x384xf32>
    %c0_30 = arith.constant 0 : index
    %c0_31 = arith.constant 0 : index
    %81 = vector.load %arg4[%c0_30, %c0_31] : memref<384x256xbf16, #tpu.memory_space<vmem>>, vector<384x256xbf16>
    %cst_32 = arith.constant dense<0.000000e+00> : vector<32x256xf32>
    %82 = tpu.matmul %78, %81, %cst_32 {dimension_numbers = #tpu.dot_dimension_numbers<[1], [0], [0], [1], [0, 0, 1, 1], [], []>} : vector<32x384xbf16>, vector<384x256xbf16>, vector<32x256xf32> -> vector<32x256xf32>
    %c0_33 = arith.constant 0 : index
    %c0_34 = arith.constant 0 : index
    %83 = vector.load %arg6[%c0_33, %c0_34] : memref<1x384xf32, #tpu.memory_space<vmem>>, vector<1x384xf32>
    %84 = vector.broadcast %83 : vector<1x384xf32> to vector<32x384xf32>
    %85 = arith.addf %80, %84 : vector<32x384xf32>
    %86 = vector.extract_strided_slice %85 {offsets = [0, 0], sizes = [32, 256], strides = [1, 1]} : vector<32x384xf32> to vector<32x256xf32>
    %87 = arith.addf %86, %82 : vector<32x256xf32>
    %88 = arith.negf %87 : vector<32x256xf32>
    %89 = math.exp %88 : vector<32x256xf32>
    %cst_35 = arith.constant 1.000000e+00 : f32
    %90 = vector.broadcast %cst_35 : f32 to vector<32x256xf32>
    %91 = arith.addf %90, %89 : vector<32x256xf32>
    %92 = arith.divf %90, %91 : vector<32x256xf32>
    %93 = vector.extract_strided_slice %92 {offsets = [0, 0], sizes = [32, 128], strides = [1, 1]} : vector<32x256xf32> to vector<32x128xf32>
    %94 = vector.extract_strided_slice %92 {offsets = [0, 128], sizes = [32, 128], strides = [1, 1]} : vector<32x256xf32> to vector<32x128xf32>
    %95 = arith.mulf %94, %1 : vector<32x128xf32>
    %c1_i32_36 = arith.constant 1 : i32
    %96 = tpu.dynamic_rotate %95 by %c1_i32_36 dim 0 : vector<32x128xf32>, i32 -> vector<32x128xf32>
    %c-1_i32_37 = arith.constant -1 : i32
    %97 = vector.broadcast %c-1_i32_37 : i32 to vector<32x1xi32>
    %98 = arith.addi %18, %97 : vector<32x1xi32>
    %c0_i32_38 = arith.constant 0 : i32
    %99 = vector.broadcast %c0_i32_38 : i32 to vector<32x1xi32>
    %100 = arith.cmpi sge, %98, %99 : vector<32x1xi32>
    %c-1_i32_39 = arith.constant -1 : i32
    %101 = vector.broadcast %c-1_i32_39 : i32 to vector<32x1xi32>
    %102 = arith.addi %18, %101 : vector<32x1xi32>
    %c16_i32_40 = arith.constant 16 : i32
    %103 = vector.broadcast %c16_i32_40 : i32 to vector<32x1xi32>
    %104 = arith.cmpi slt, %102, %103 : vector<32x1xi32>
    %105 = arith.andi %100, %104 : vector<32x1xi1>
    %cst_41 = arith.constant 0.000000e+00 : f32
    %106 = vector.shape_cast %105 : vector<32x1xi1> to vector<32x1xi1>
    %107 = vector.broadcast %106 : vector<32x1xi1> to vector<32x128xi1>
    %108 = vector.broadcast %cst_41 : f32 to vector<32x128xf32>
    %109 = arith.select %107, %96, %108 : vector<32x128xi1>, vector<32x128xf32>
    %c31_i32_42 = arith.constant 31 : i32
    %110 = tpu.dynamic_rotate %95 by %c31_i32_42 dim 0 : vector<32x128xf32>, i32 -> vector<32x128xf32>
    %c1_i32_43 = arith.constant 1 : i32
    %111 = vector.broadcast %c1_i32_43 : i32 to vector<32x1xi32>
    %112 = arith.addi %18, %111 : vector<32x1xi32>
    %c0_i32_44 = arith.constant 0 : i32
    %113 = vector.broadcast %c0_i32_44 : i32 to vector<32x1xi32>
    %114 = arith.cmpi sge, %112, %113 : vector<32x1xi32>
    %c1_i32_45 = arith.constant 1 : i32
    %115 = vector.broadcast %c1_i32_45 : i32 to vector<32x1xi32>
    %116 = arith.addi %18, %115 : vector<32x1xi32>
    %c16_i32_46 = arith.constant 16 : i32
    %117 = vector.broadcast %c16_i32_46 : i32 to vector<32x1xi32>
    %118 = arith.cmpi slt, %116, %117 : vector<32x1xi32>
    %119 = arith.andi %114, %118 : vector<32x1xi1>
    %cst_47 = arith.constant 0.000000e+00 : f32
    %120 = vector.shape_cast %119 : vector<32x1xi1> to vector<32x1xi1>
    %121 = vector.broadcast %120 : vector<32x1xi1> to vector<32x128xi1>
    %122 = vector.broadcast %cst_47 : f32 to vector<32x128xf32>
    %123 = arith.select %121, %110, %122 : vector<32x128xi1>, vector<32x128xf32>
    %124 = tpu.concatenate %109, %95, %123 in 1 : vector<32x128xf32>, vector<32x128xf32>, vector<32x128xf32> -> vector<32x384xf32>
    %125 = arith.truncf %124 : vector<32x384xf32> to vector<32x384xbf16>
    %c0_48 = arith.constant 0 : index
    %c0_49 = arith.constant 0 : index
    %126 = vector.load %arg5[%c0_48, %c0_49] : memref<384x128xbf16, #tpu.memory_space<vmem>>, vector<384x128xbf16>
    %cst_50 = arith.constant dense<0.000000e+00> : vector<32x128xf32>
    %127 = tpu.matmul %125, %126, %cst_50 {dimension_numbers = #tpu.dot_dimension_numbers<[1], [0], [0], [1], [0, 0, 1, 1], [], []>} : vector<32x384xbf16>, vector<384x128xbf16>, vector<32x128xf32> -> vector<32x128xf32>
    %128 = vector.extract_strided_slice %85 {offsets = [0, 256], sizes = [32, 128], strides = [1, 1]} : vector<32x384xf32> to vector<32x128xf32>
    %129 = arith.addf %128, %127 : vector<32x128xf32>
    %cst_51 = arith.constant 0.00999999977 : f32
    %130 = vector.broadcast %cst_51 : f32 to vector<32x128xf32>
    %131 = arith.mulf %130, %129 : vector<32x128xf32>
    %132 = arith.maximumf %129, %131 : vector<32x128xf32>
    %cst_52 = arith.constant 1.000000e+00 : f32
    %133 = vector.broadcast %cst_52 : f32 to vector<32x128xf32>
    %134 = arith.subf %133, %93 : vector<32x128xf32>
    %135 = arith.mulf %134, %132 : vector<32x128xf32>
    %136 = arith.mulf %93, %1 : vector<32x128xf32>
    %137 = arith.addf %135, %136 : vector<32x128xf32>
    %c0_53 = arith.constant 0 : index
    %c0_54 = arith.constant 0 : index
    %138 = vector.load %arg7[%c0_53, %c0_54] : memref<32x128xf32, #tpu.memory_space<vmem>>, vector<32x128xf32>
    tpu.vector_store %arg7[%c0_53, %c0_54], %137 {strides = array<i32>} : memref<32x128xf32, #tpu.memory_space<vmem>>, vector<32x128xf32>,
    return
  }
  func.func @transform_0(%arg0: i32) -> (i32, i32) {
    %c0_i32 = arith.constant 0 : i32
    %c0_i32_0 = arith.constant 0 : i32
    %c0_i32_1 = arith.constant 0 : i32
    return %c0_i32, %c0_i32_0 : i32, i32
  }
  func.func @transform_1(%arg0: i32) -> (i32, i32) {
    %c0_i32 = arith.constant 0 : i32
    %c0_i32_0 = arith.constant 0 : i32
    %c0_i32_1 = arith.constant 0 : i32
    return %c0_i32, %c0_i32_0 : i32, i32
  }
  func.func @transform_2(%arg0: i32) -> (i32, i32) {
    %c0_i32 = arith.constant 0 : i32
    %c0_i32_0 = arith.constant 0 : i32
    %c0_i32_1 = arith.constant 0 : i32
    return %c0_i32, %c0_i32_0 : i32, i32
  }
  func.func @transform_3(%arg0: i32) -> (i32, i32) {
    %c0_i32 = arith.constant 0 : i32
    %c0_i32_0 = arith.constant 0 : i32
    %c0_i32_1 = arith.constant 0 : i32
    return %c0_i32, %c0_i32_0 : i32, i32
  }
  func.func @transform_4(%arg0: i32) -> (i32, i32) {
    %c0_i32 = arith.constant 0 : i32
    %c0_i32_0 = arith.constant 0 : i32
    %c0_i32_1 = arith.constant 0 : i32
    return %c0_i32, %c0_i32_0 : i32, i32
  }
  func.func @transform_5(%arg0: i32) -> (i32, i32) {
    %c0_i32 = arith.constant 0 : i32
    %c0_i32_0 = arith.constant 0 : i32
    %c0_i32_1 = arith.constant 0 : i32
    return %c0_i32, %c0_i32_0 : i32, i32
  }
  func.func @transform_6(%arg0: i32) -> (i32, i32) {
    %c0_i32 = arith.constant 0 : i32
    %c0_i32_0 = arith.constant 0 : i32
    %c0_i32_1 = arith.constant 0 : i32
    return %c0_i32, %c0_i32_0 : i32, i32
  }
}

</mosaic_0001>

<llo_original>
// kernel: tpu_custom_call.1
$region0: #{tpu_custom_call.1}
  #allocation0 [shape = 'u32[]', space=smem, size = 0x4, offset = 0x4, fixed_abs, tag = 'smem constant byte address 0x4 - core index']
  #allocation1 [shape = 'u32[144,128]{1,0:T(1,128)}', space=vmem, size = 0x12000, scoped, tag = 'internal scratch']
  %s0 = inlined_call_operand.vmem [shape: f32[32,64], index: 0, kind: input, shape index: {}]
  %s1 = inlined_call_operand.hbm [shape: f32[32,128], index: 1, kind: input, shape index: {}, may-alias: {1,6}]
  %s2 = inlined_call_operand.hbm [shape: bf16[192,384], index: 2, kind: input, shape index: {}]
  %s3 = inlined_call_operand.hbm [shape: bf16[384,256], index: 3, kind: input, shape index: {}]
  %s4 = inlined_call_operand.hbm [shape: bf16[384,128], index: 4, kind: input, shape index: {}]
  %s5 = inlined_call_operand.vmem [shape: f32[1,384], index: 5, kind: input, shape index: {}]
  %s6 = inlined_call_operand.hbm [shape: f32[32,128], index: 6, kind: output, shape index: {}, may-alias: {1,6}]
  %s7 = sld [smem:[#allocation0]]
  $region50: #{tpu_custom_call.1} parent=0
    _
  %s9 = ssub.s32 1, %s7
  %s10 = scalar_select 0, %s9, %s7
  $region1: #{tpu_custom_call.1} parent=0
    #allocation2 [shape = 'u8[16384]{0}', space=vmem, size = 0x4000, scoped, tag = 'input window, operand 1, single buffered']
    #allocation3 [shape = 's32[1]{0}', space=sflag, size = 0x4, scoped, tag = 'scoped memory for tpu_custom_call.1']
    #allocation4 [shape = 's32[1]{0}', space=sflag, size = 0x4, scoped, tag = 'scoped memory for tpu_custom_call.1']
    #allocation5 [shape = 'u8[147456]{0}', space=vmem, size = 0x24000, scoped, tag = 'input window, operand 2, single buffered']
    #allocation6 [shape = 's32[1]{0}', space=sflag, size = 0x4, scoped, tag = 'scoped memory for tpu_custom_call.1']
    #allocation7 [shape = 'u8[196608]{0}', space=vmem, size = 0x30000, scoped, tag = 'input window, operand 3, single buffered']
    #allocation8 [shape = 'u8[98304]{0}', space=vmem, size = 0x18000, scoped, tag = 'input window, operand 4, single buffered']
    #allocation9 [shape = 's32[1]{0}', space=sflag, size = 0x4, scoped, tag = 'scoped memory for tpu_custom_call.1']
    #allocation10 [shape = 'u8[16384]{0}', space=vmem, size = 0x4000, scoped, tag = 'output window, operand 0, single buffered']
    %11 = vsyncpa [#allocation3], 0
    %12 = vsyncpa [#allocation6], 0
    %13 = vsyncpa [#allocation9], 0
    %14 = vsyncpa [#allocation4], 0
    // Predicated region
    $region2: #{tpu_custom_call.1} parent=1 // pred_check
      _
    $region3: #{tpu_custom_call.1} parent=1 // pred_check_branch
      %16 = sbr.rel (0) target = $region5
    $region4: #{tpu_custom_call.1} parent=1 // pred_region
      _
    $region5: #{tpu_custom_call.1} parent=1 // pred_fallthru
      _
    // Predicated region
    $region6: #{tpu_custom_call.1} parent=1 // pred_check
      _
    $region7: #{tpu_custom_call.1} parent=1 // pred_check_branch
      %18 = sbr.rel (0) target = $region9
    $region8: #{tpu_custom_call.1} parent=1 // pred_region
      %s20 = ssub.s32 512, 512
      %21 = vsyncadd [#allocation3], %s20
      %s22 = sshll.u32 [#allocation2], 4
      %s23 = int_to_ptr.vmem [resolvable:$true] %s22
      %28 = dma.hbm_to_vmem [thread:$0]  %s1, 512, %s23, [#allocation3], 128, 128, 8
    $region9: #{tpu_custom_call.1} parent=1 // pred_fallthru
      _
    // Predicated region
    $region10: #{tpu_custom_call.1} parent=1 // pred_check
      _
    $region11: #{tpu_custom_call.1} parent=1 // pred_check_branch
      %30 = sbr.rel (0) target = $region13
    $region12: #{tpu_custom_call.1} parent=1 // pred_region
      %s32 = ssub.s32 4608, 4608
      %33 = vsyncadd [#allocation6], %s32
      %s34 = sshll.u32 [#allocation5], 4
      %s35 = int_to_ptr.vmem [resolvable:$true] %s34
      %40 = dma.hbm_to_vmem [thread:$0]  %s2, 4608, %s35, [#allocation6], 192, 192, 12
    $region13: #{tpu_custom_call.1} parent=1 // pred_fallthru
      _
    // Predicated region
    $region14: #{tpu_custom_call.1} parent=1 // pred_check
      _
    $region15: #{tpu_custom_call.1} parent=1 // pred_check_branch
      %42 = sbr.rel (0) target = $region17
    $region16: #{tpu_custom_call.1} parent=1 // pred_region
      %s44 = ssub.s32 6144, 6144
      %45 = vsyncadd [#allocation6], %s44
      %s46 = sshll.u32 [#allocation7], 4
      %s47 = int_to_ptr.vmem [resolvable:$true] %s46
      %52 = dma.hbm_to_vmem [thread:$0]  %s3, 6144, %s47, [#allocation6], 128, 128, 8
    $region17: #{tpu_custom_call.1} parent=1 // pred_fallthru
      _
    // Predicated region
    $region18: #{tpu_custom_call.1} parent=1 // pred_check
      _
    $region19: #{tpu_custom_call.1} parent=1 // pred_check_branch
      %54 = sbr.rel (0) target = $region21
    $region20: #{tpu_custom_call.1} parent=1 // pred_region
      %s56 = ssub.s32 3072, 3072
      %57 = vsyncadd [#allocation9], %s56
      %s58 = sshll.u32 [#allocation8], 4
      %s59 = int_to_ptr.vmem [resolvable:$true] %s58
      %64 = dma.hbm_to_vmem [thread:$0]  %s4, 3072, %s59, [#allocation9], 64, 64, 4
    $region21: #{tpu_custom_call.1} parent=1 // pred_fallthru
      _
    // Predicated region
    $region22: #{tpu_custom_call.1} parent=1 // pred_check
      _
    $region23: #{tpu_custom_call.1} parent=1 // pred_check_branch
      %66 = sbr.rel (0) target = $region25
    $region24: #{tpu_custom_call.1} parent=1 // pred_region
      _
    $region25: #{tpu_custom_call.1} parent=1 // pred_fallthru
      _
    // Predicated region
    $region26: #{tpu_custom_call.1} parent=1 // pred_check
      _
    $region27: #{tpu_custom_call.1} parent=1 // pred_check_branch
      %68 = sbr.rel (0) target = $region29
    $region28: #{tpu_custom_call.1} parent=1 // pred_region
      %69 = dma.done [#allocation3], 512
    $region29: #{tpu_custom_call.1} parent=1 // pred_fallthru
      _
    // Predicated region
    $region30: #{tpu_custom_call.1} parent=1 // pred_check
      _
    $region31: #{tpu_custom_call.1} parent=1 // pred_check_branch
      %71 = sbr.rel (0) target = $region33
    $region32: #{tpu_custom_call.1} parent=1 // pred_region
      %72 = dma.done [#allocation6], 4608
    $region33: #{tpu_custom_call.1} parent=1 // pred_fallthru
      _
    // Predicated region
    $region34: #{tpu_custom_call.1} parent=1 // pred_check
      _
    $region35: #{tpu_custom_call.1} parent=1 // pred_check_branch
      %74 = sbr.rel (0) target = $region37
    $region36: #{tpu_custom_call.1} parent=1 // pred_region
      %75 = dma.done [#allocation6], 6144
    $region37: #{tpu_custom_call.1} parent=1 // pred_fallthru
      _
    // Predicated region
    $region38: #{tpu_custom_call.1} parent=1 // pred_check
      _
    $region39: #{tpu_custom_call.1} parent=1 // pred_check_branch
      %77 = sbr.rel (0) target = $region41
    $region40: #{tpu_custom_call.1} parent=1 // pred_region
      %78 = dma.done [#allocation9], 3072
    $region41: #{tpu_custom_call.1} parent=1 // pred_fallthru
      _
    %v80 = vld [vmem:[%s0] sm:$0xff]
    %v81 = vld [vmem:[%s0 + $0x8] sm:$0xff]
    %v82 = vld [vmem:[%s0 + $0x10] sm:$0xff]
    %v83 = vld [vmem:[%s0 + $0x18] sm:$0xff]
    %v84 = vld [vmem:[#allocation2] sm:$0xff]
    %v85 = vld [vmem:[#allocation2 + $0x8] sm:$0xff]
    %v86 = vld [vmem:[#allocation2 + $0x10] sm:$0xff]
    %v87 = vld [vmem:[#allocation2 + $0x18] sm:$0xff]
    %v88 = vlaneseq
    %v89 = vshrl.u32 %v88, 7
    %v90 = vadd.s32 %v89, 8
    %v91 = vadd.s32 %v89, 16
    %v92 = vadd.s32 %v89, 24
    %vm93 = vcmp.lt.s32.totalorder %v89, 0
    %v94 = vsub.s32 0, %v89
    %v95 = vsel %vm93, %v94, %v89
    %v96 = vshrl.u32 %v95, 4
    %v97 = vand.u32 %v95, 15
    %v98 = vsub.s32 0, %v97
    %v99 = vsel %vm93, %v98, %v97
    %vm100 = vcmp.lt.s32.totalorder %v90, 0
    %v101 = vsub.s32 0, %v90
    %v102 = vsel %vm100, %v101, %v90
    %v103 = vshrl.u32 %v102, 4
    %v104 = vand.u32 %v102, 15
    %v105 = vsub.s32 0, %v104
    %v106 = vsel %vm100, %v105, %v104
    %vm107 = vcmp.lt.s32.totalorder %v91, 0
    %v108 = vsub.s32 0, %v91
    %v109 = vsel %vm107, %v108, %v91
    %v110 = vshrl.u32 %v109, 4
    %v111 = vand.u32 %v109, 15
    %v112 = vsub.s32 0, %v111
    %v113 = vsel %vm107, %v112, %v111
    %vm114 = vcmp.lt.s32.totalorder %v92, 0
    %v115 = vsub.s32 0, %v92
    %v116 = vsel %vm114, %v115, %v92
    %v117 = vshrl.u32 %v116, 4
    %v118 = vand.u32 %v116, 15
    %v119 = vsub.s32 0, %v118
    %v120 = vsel %vm114, %v119, %v118
    %vm121 = vcmp.ne.s32.totalorder %v99, 0
    %vm122 = vcmp.ne.s32.totalorder %v106, 0
    %vm123 = vcmp.ne.s32.totalorder %v113, 0
    %vm124 = vcmp.ne.s32.totalorder %v120, 0
    %vm125 = vcmp.lt.s32.totalorder %v99, 0
    %vm126 = vcmp.lt.s32.totalorder %v106, 0
    %vm127 = vcmp.lt.s32.totalorder %v113, 0
    %vm128 = vcmp.lt.s32.totalorder %v120, 0
    %vm129 = vmand %vm125, %vm121
    %vm130 = vmand %vm126, %vm122
    %vm131 = vmand %vm127, %vm123
    %vm132 = vmand %vm128, %vm124
    %v133 = vadd.s32 %v99, 16
    %v134 = vadd.s32 %v106, 16
    %v135 = vadd.s32 %v113, 16
    %v136 = vadd.s32 %v120, 16
    %v137 = vsel %vm129, %v133, %v99
    %v138 = vsel %vm130, %v134, %v106
    %v139 = vsel %vm131, %v135, %v113
    %v140 = vsel %vm132, %v136, %v120
    %v141 = vrot.slane %v80, 7
    %v142 = vrot.slane %v81, 7
    %v143 = vrot.slane %v82, 7
    %v144 = vrot.slane %v83, 7
    %vm145 = vcmp.lt.s32.totalorder %v89, 1
    %v146 = vsel %vm145, %v143, %v144
    %v147 = vsel %vm145, %v142, %v143
    %v148 = vsel %vm145, %v141, %v142
    %v149 = vsel %vm145, %v144, %v141
    %v150 = vadd.s32 %v137, 4294967295
    %v151 = vadd.s32 %v138, 4294967295
    %v152 = vadd.s32 %v139, 4294967295
    %v153 = vadd.s32 %v140, 4294967295
    %vm154 = vcmp.ge.s32.totalorder %v150, 0
    %vm155 = vcmp.ge.s32.totalorder %v151, 0
    %vm156 = vcmp.ge.s32.totalorder %v152, 0
    %vm157 = vcmp.ge.s32.totalorder %v153, 0
    %vm158 = vcmp.lt.s32.totalorder %v150, 16
    %vm159 = vcmp.lt.s32.totalorder %v151, 16
    %vm160 = vcmp.lt.s32.totalorder %v152, 16
    %vm161 = vcmp.lt.s32.totalorder %v153, 16
    %vm162 = vmand %vm154, %vm158
    %vm163 = vmand %vm155, %vm159
    %vm164 = vmand %vm156, %vm160
    %vm165 = vmand %vm157, %vm161
    %v166 = vsel %vm162, 1, 0
    %v167 = vsel %vm163, 1, 0
    %v168 = vsel %vm164, 1, 0
    %v169 = vsel %vm165, 1, 0
    %vm170 = vcmp.eq.s32.totalorder %v166, 1
    %vm171 = vcmp.eq.s32.totalorder %v167, 1
    %vm172 = vcmp.eq.s32.totalorder %v168, 1
    %vm173 = vcmp.eq.s32.totalorder %v169, 1
    %v174 = vsel %vm170, %v149, 0.0
    %v175 = vsel %vm171, %v148, 0.0
    %v176 = vsel %vm172, %v147, 0.0
    %v177 = vsel %vm173, %v146, 0.0
    %v178 = vrot.slane %v80, 1
    %v179 = vrot.slane %v81, 1
    %v180 = vrot.slane %v82, 1
    %v181 = vrot.slane %v83, 1
    %vm182 = vcmp.lt.s32.totalorder %v89, 7
    %v183 = vsel %vm182, %v180, %v181
    %v184 = vsel %vm182, %v179, %v180
    %v185 = vsel %vm182, %v178, %v179
    %v186 = vsel %vm182, %v181, %v178
    %v187 = vadd.s32 %v137, 1
    %v188 = vadd.s32 %v138, 1
    %v189 = vadd.s32 %v139, 1
    %v190 = vadd.s32 %v140, 1
    %vm191 = vcmp.ge.s32.totalorder %v187, 0
    %vm192 = vcmp.ge.s32.totalorder %v188, 0
    %vm193 = vcmp.ge.s32.totalorder %v189, 0
    %vm194 = vcmp.ge.s32.totalorder %v190, 0
    %vm195 = vcmp.lt.s32.totalorder %v187, 16
    %vm196 = vcmp.lt.s32.totalorder %v188, 16
    %vm197 = vcmp.lt.s32.totalorder %v189, 16
    %vm198 = vcmp.lt.s32.totalorder %v190, 16
    %vm199 = vmand %vm191, %vm195
    %vm200 = vmand %vm192, %vm196
    %vm201 = vmand %vm193, %vm197
    %vm202 = vmand %vm194, %vm198
    %v203 = vsel %vm199, 1, 0
    %v204 = vsel %vm200, 1, 0
    %v205 = vsel %vm201, 1, 0
    %v206 = vsel %vm202, 1, 0
    %vm207 = vcmp.eq.s32.totalorder %v203, 1
    %vm208 = vcmp.eq.s32.totalorder %v204, 1
    %vm209 = vcmp.eq.s32.totalorder %v205, 1
    %vm210 = vcmp.eq.s32.totalorder %v206, 1
    %v211 = vsel %vm207, %v185, 0.0
    %v212 = vsel %vm208, %v184, 0.0
    %v213 = vsel %vm209, %v183, 0.0
    %v214 = vsel %vm210, %v186, 0.0
    %219 = vrot.lane.b32.xlu0 %v80, 64
    %v220 = vpop.permute.xlu0 %219
    %221 = vrot.lane.b32.xlu0 %v81, 64
    %v222 = vpop.permute.xlu0 %221
    %223 = vrot.lane.b32.xlu0 %v82, 64
    %v224 = vpop.permute.xlu0 %223
    %225 = vrot.lane.b32.xlu0 %v83, 64
    %v226 = vpop.permute.xlu0 %225
    %vm231 = vcmask 523264
    %v232 = vsel %vm231, %v174, %v220
    %v233 = vsel %vm231, %v175, %v222
    %v234 = vsel %vm231, %v176, %v224
    %v235 = vsel %vm231, %v177, %v226
    %v236 = vpack.c.bf16 %v233, %v232
    %v237 = vpack.c.bf16 %v212, %v211
    %v238 = vpack.c.bf16 %v235, %v234
    %v239 = vpack.c.bf16 %v214, %v213
    %v240 = vrot.slane %v84, 7
    %v241 = vrot.slane %v85, 7
    %v242 = vrot.slane %v86, 7
    %v243 = vrot.slane %v87, 7
    %v244 = vsel %vm145, %v242, %v243
    %v245 = vsel %vm145, %v241, %v242
    %v246 = vsel %vm145, %v240, %v241
    %v247 = vsel %vm145, %v243, %v240
    %v248 = vsel %vm170, %v247, 0.0
    %v249 = vsel %vm171, %v246, 0.0
    %v250 = vsel %vm172, %v245, 0.0
    %v251 = vsel %vm173, %v244, 0.0
    %v252 = vrot.slane %v84, 1
    %v253 = vrot.slane %v85, 1
    %v254 = vrot.slane %v86, 1
    %v255 = vrot.slane %v87, 1
    %v256 = vsel %vm182, %v254, %v255
    %v257 = vsel %vm182, %v253, %v254
    %v258 = vsel %vm182, %v252, %v253
    %v259 = vsel %vm182, %v255, %v252
    %v260 = vsel %vm207, %v258, 0.0
    %v261 = vsel %vm208, %v257, 0.0
    %v262 = vsel %vm209, %v256, 0.0
    %v263 = vsel %vm210, %v259, 0.0
    %v264 = vpack.c.bf16 %v249, %v248
    %v265 = vpack.c.bf16 %v85, %v84
    %v266 = vpack.c.bf16 %v261, %v260
    %v267 = vpack.c.bf16 %v251, %v250
    %v268 = vpack.c.bf16 %v87, %v86
    %v269 = vpack.c.bf16 %v263, %v262
    %v270 = vld [vmem:[#allocation5] sm:$0xff]
    %v271 = vld [vmem:[#allocation5 + $0x8] sm:$0xf]
    %v272 = vld [vmem:[#allocation5 + $0xc] sm:$0xff]
    %v273 = vld [vmem:[#allocation5 + $0x14] sm:$0xf]
    %v274 = vld [vmem:[#allocation5 + $0x18] sm:$0xff]
    %v275 = vld [vmem:[#allocation5 + $0x20] sm:$0xf]
    %v276 = vld [vmem:[#allocation5 + $0x24] sm:$0xff]
    %v277 = vld [vmem:[#allocation5 + $0x2c] sm:$0xf]
    %v278 = vld [vmem:[#allocation5 + $0x30] sm:$0xff]
    %v279 = vld [vmem:[#allocation5 + $0x38] sm:$0xf]
    %v280 = vld [vmem:[#allocation5 + $0x3c] sm:$0xff]
    %v281 = vld [vmem:[#allocation5 + $0x44] sm:$0xf]
    %v282 = vld [vmem:[#allocation5 + $0x48] sm:$0xff]
    %v283 = vld [vmem:[#allocation5 + $0x50] sm:$0xf]
    %v284 = vld [vmem:[#allocation5 + $0x54] sm:$0xff]
    %v285 = vld [vmem:[#allocation5 + $0x5c] sm:$0xf]
    %v286 = vld [vmem:[#allocation5 + $0x60] sm:$0xff]
    %v287 = vld [vmem:[#allocation5 + $0x68] sm:$0xf]
    %v288 = vld [vmem:[#allocation5 + $0x6c] sm:$0xff]
    %v289 = vld [vmem:[#allocation5 + $0x74] sm:$0xf]
    %v290 = vld [vmem:[#allocation5 + $0x78] sm:$0xff]
    %v291 = vld [vmem:[#allocation5 + $0x80] sm:$0xf]
    %v292 = vld [vmem:[#allocation5 + $0x84] sm:$0xff]
    %v293 = vld [vmem:[#allocation5 + $0x8c] sm:$0xf]
    %v294 = vld [vmem:[#allocation5 + $0x90] sm:$0xff]
    %v295 = vld [vmem:[#allocation5 + $0x98] sm:$0xf]
    %v296 = vld [vmem:[#allocation5 + $0x9c] sm:$0xff]
    %v297 = vld [vmem:[#allocation5 + $0xa4] sm:$0xf]
    %v298 = vld [vmem:[#allocation5 + $0xa8] sm:$0xff]
    %v299 = vld [vmem:[#allocation5 + $0xb0] sm:$0xf]
    %v300 = vld [vmem:[#allocation5 + $0xb4] sm:$0xff]
    %v301 = vld [vmem:[#allocation5 + $0xbc] sm:$0xf]
    %v302 = vld [vmem:[#allocation5 + $0xc0] sm:$0xff]
    %v303 = vld [vmem:[#allocation5 + $0xc8] sm:$0xf]
    %v304 = vld [vmem:[#allocation5 + $0xcc] sm:$0xff]
    %v305 = vld [vmem:[#allocation5 + $0xd4] sm:$0xf]
    %v306 = vld [vmem:[#allocation5 + $0xd8] sm:$0xff]
    %v307 = vld [vmem:[#allocation5 + $0xe0] sm:$0xf]
    %v308 = vld [vmem:[#allocation5 + $0xe4] sm:$0xff]
    %v309 = vld [vmem:[#allocation5 + $0xec] sm:$0xf]
    %v310 = vld [vmem:[#allocation5 + $0xf0] sm:$0xff]
    %v311 = vld [vmem:[#allocation5 + $0xf8] sm:$0xf]
    %v312 = vld [vmem:[#allocation5 + $0xfc] sm:$0xff]
    %v313 = vld [vmem:[#allocation5 + $0x104] sm:$0xf]
    %v314 = vld [vmem:[#allocation5 + $0x108] sm:$0xff]
    %v315 = vld [vmem:[#allocation5 + $0x110] sm:$0xf]
    %v316 = vld [vmem:[#allocation5 + $0x114] sm:$0xff]
    %v317 = vld [vmem:[#allocation5 + $0x11c] sm:$0xf]
    %v318 = vld [vmem:[#allocation7] sm:$0xff]
    %v319 = vld [vmem:[#allocation7 + $0x8] sm:$0xff]
    %v320 = vld [vmem:[#allocation7 + $0x10] sm:$0xff]
    %v321 = vld [vmem:[#allocation7 + $0x18] sm:$0xff]
    %v322 = vld [vmem:[#allocation7 + $0x20] sm:$0xff]
    %v323 = vld [vmem:[#allocation7 + $0x28] sm:$0xff]
    %v324 = vld [vmem:[#allocation7 + $0x30] sm:$0xff]
    %v325 = vld [vmem:[#allocation7 + $0x38] sm:$0xff]
    %v326 = vld [vmem:[#allocation7 + $0x40] sm:$0xff]
    %v327 = vld [vmem:[#allocation7 + $0x48] sm:$0xff]
    %v328 = vld [vmem:[#allocation7 + $0x50] sm:$0xff]
    %v329 = vld [vmem:[#allocation7 + $0x58] sm:$0xff]
    %v330 = vld [vmem:[#allocation7 + $0x60] sm:$0xff]
    %v331 = vld [vmem:[#allocation7 + $0x68] sm:$0xff]
    %v332 = vld [vmem:[#allocation7 + $0x70] sm:$0xff]
    %v333 = vld [vmem:[#allocation7 + $0x78] sm:$0xff]
    %v334 = vld [vmem:[#allocation7 + $0x80] sm:$0xff]
    %v335 = vld [vmem:[#allocation7 + $0x88] sm:$0xff]
    %v336 = vld [vmem:[#allocation7 + $0x90] sm:$0xff]
    %v337 = vld [vmem:[#allocation7 + $0x98] sm:$0xff]
    %v338 = vld [vmem:[#allocation7 + $0xa0] sm:$0xff]
    %v339 = vld [vmem:[#allocation7 + $0xa8] sm:$0xff]
    %v340 = vld [vmem:[#allocation7 + $0xb0] sm:$0xff]
    %v341 = vld [vmem:[#allocation7 + $0xb8] sm:$0xff]
    %v342 = vld [vmem:[#allocation7 + $0xc0] sm:$0xff]
    %v343 = vld [vmem:[#allocation7 + $0xc8] sm:$0xff]
    %v344 = vld [vmem:[#allocation7 + $0xd0] sm:$0xff]
    %v345 = vld [vmem:[#allocation7 + $0xd8] sm:$0xff]
    %v346 = vld [vmem:[#allocation7 + $0xe0] sm:$0xff]
    %v347 = vld [vmem:[#allocation7 + $0xe8] sm:$0xff]
    %v348 = vld [vmem:[#allocation7 + $0xf0] sm:$0xff]
    %v349 = vld [vmem:[#allocation7 + $0xf8] sm:$0xff]
    %v350 = vld [vmem:[#allocation7 + $0x100] sm:$0xff]
    %v351 = vld [vmem:[#allocation7 + $0x108] sm:$0xff]
    %v352 = vld [vmem:[#allocation7 + $0x110] sm:$0xff]
    %v353 = vld [vmem:[#allocation7 + $0x118] sm:$0xff]
    %v354 = vld [vmem:[#allocation7 + $0x120] sm:$0xff]
    %v355 = vld [vmem:[#allocation7 + $0x128] sm:$0xff]
    %v356 = vld [vmem:[#allocation7 + $0x130] sm:$0xff]
    %v357 = vld [vmem:[#allocation7 + $0x138] sm:$0xff]
    %v358 = vld [vmem:[#allocation7 + $0x140] sm:$0xff]
    %v359 = vld [vmem:[#allocation7 + $0x148] sm:$0xff]
    %v360 = vld [vmem:[#allocation7 + $0x150] sm:$0xff]
    %v361 = vld [vmem:[#allocation7 + $0x158] sm:$0xff]
    %v362 = vld [vmem:[#allocation7 + $0x160] sm:$0xff]
    %v363 = vld [vmem:[#allocation7 + $0x168] sm:$0xff]
    %v364 = vld [vmem:[#allocation7 + $0x170] sm:$0xff]
    %v365 = vld [vmem:[#allocation7 + $0x178] sm:$0xff]
    %v414 = vunpack.c.l.b16 %v318
    %v415 = vunpack.c.h.b16 %v318
    %v416 = vunpack.c.l.b16 %v319
    %v417 = vunpack.c.h.b16 %v319
    %v418 = vunpack.c.l.b16 %v320
    %v419 = vunpack.c.h.b16 %v320
    %v420 = vunpack.c.l.b16 %v321
    %v421 = vunpack.c.h.b16 %v321
    %v422 = vunpack.c.l.b16 %v322
    %v423 = vunpack.c.h.b16 %v322
    %v424 = vunpack.c.l.b16 %v323
    %v425 = vunpack.c.h.b16 %v323
    %v426 = vunpack.c.l.b16 %v324
    %v427 = vunpack.c.h.b16 %v324
    %v428 = vunpack.c.l.b16 %v325
    %v429 = vunpack.c.h.b16 %v325
    %v430 = vunpack.c.l.b16 %v326
    %v431 = vunpack.c.h.b16 %v326
    %v432 = vunpack.c.l.b16 %v327
    %v433 = vunpack.c.h.b16 %v327
    %v434 = vunpack.c.l.b16 %v328
    %v435 = vunpack.c.h.b16 %v328
    %v436 = vunpack.c.l.b16 %v329
    %v437 = vunpack.c.h.b16 %v329
    %v438 = vunpack.c.l.b16 %v330
    %v439 = vunpack.c.h.b16 %v330
    %v440 = vunpack.c.l.b16 %v331
    %v441 = vunpack.c.h.b16 %v331
    %v442 = vunpack.c.l.b16 %v332
    %v443 = vunpack.c.h.b16 %v332
    %v444 = vunpack.c.l.b16 %v333
    %v445 = vunpack.c.h.b16 %v333
    %v446 = vunpack.c.l.b16 %v334
    %v447 = vunpack.c.h.b16 %v334
    %v448 = vunpack.c.l.b16 %v335
    %v449 = vunpack.c.h.b16 %v335
    %v450 = vunpack.c.l.b16 %v336
    %v451 = vunpack.c.h.b16 %v336
    %v452 = vunpack.c.l.b16 %v337
    %v453 = vunpack.c.h.b16 %v337
    %v454 = vunpack.c.l.b16 %v338
    %v455 = vunpack.c.h.b16 %v338
    %v456 = vunpack.c.l.b16 %v339
    %v457 = vunpack.c.h.b16 %v339
    %v458 = vunpack.c.l.b16 %v340
    %v459 = vunpack.c.h.b16 %v340
    %v460 = vunpack.c.l.b16 %v341
    %v461 = vunpack.c.h.b16 %v341
    %v462 = vunpack.c.l.b16 %v342
    %v463 = vunpack.c.h.b16 %v342
    %v464 = vunpack.c.l.b16 %v343
    %v465 = vunpack.c.h.b16 %v343
    %v466 = vunpack.c.l.b16 %v344
    %v467 = vunpack.c.h.b16 %v344
    %v468 = vunpack.c.l.b16 %v345
    %v469 = vunpack.c.h.b16 %v345
    %v470 = vunpack.c.l.b16 %v346
    %v471 = vunpack.c.h.b16 %v346
    %v472 = vunpack.c.l.b16 %v347
    %v473 = vunpack.c.h.b16 %v347
    %v474 = vunpack.c.l.b16 %v348
    %v475 = vunpack.c.h.b16 %v348
    %v476 = vunpack.c.l.b16 %v349
    %v477 = vunpack.c.h.b16 %v349
    %v478 = vunpack.c.l.b16 %v350
    %v479 = vunpack.c.h.b16 %v350
    %v480 = vunpack.c.l.b16 %v351
    %v481 = vunpack.c.h.b16 %v351
    %v482 = vunpack.c.l.b16 %v352
    %v483 = vunpack.c.h.b16 %v352
    %v484 = vunpack.c.l.b16 %v353
    %v485 = vunpack.c.h.b16 %v353
    %v486 = vunpack.c.l.b16 %v354
    %v487 = vunpack.c.h.b16 %v354
    %v488 = vunpack.c.l.b16 %v355
    %v489 = vunpack.c.h.b16 %v355
    %v490 = vunpack.c.l.b16 %v356
    %v491 = vunpack.c.h.b16 %v356
    %v492 = vunpack.c.l.b16 %v357
    %v493 = vunpack.c.h.b16 %v357
    %v494 = vunpack.c.l.b16 %v358
    %v495 = vunpack.c.h.b16 %v358
    %v496 = vunpack.c.l.b16 %v359
    %v497 = vunpack.c.h.b16 %v359
    %v498 = vunpack.c.l.b16 %v360
    %v499 = vunpack.c.h.b16 %v360
    %v500 = vunpack.c.l.b16 %v361
    %v501 = vunpack.c.h.b16 %v361
    %v502 = vunpack.c.l.b16 %v362
    %v503 = vunpack.c.h.b16 %v362
    %v504 = vunpack.c.l.b16 %v363
    %v505 = vunpack.c.h.b16 %v363
    %v506 = vunpack.c.l.b16 %v364
    %v507 = vunpack.c.h.b16 %v364
    %v508 = vunpack.c.l.b16 %v365
    %v509 = vunpack.c.h.b16 %v365
    %v510 = vpack.c.b16 %v416, %v414
    %v511 = vpack.c.b16 %v417, %v415
    %v512 = vpack.c.b16 %v420, %v418
    %v513 = vpack.c.b16 %v421, %v419
    %v514 = vpack.c.b16 %v424, %v422
    %v515 = vpack.c.b16 %v425, %v423
    %v516 = vpack.c.b16 %v428, %v426
    %v517 = vpack.c.b16 %v429, %v427
    %v518 = vpack.c.b16 %v432, %v430
    %v519 = vpack.c.b16 %v433, %v431
    %v520 = vpack.c.b16 %v436, %v434
    %v521 = vpack.c.b16 %v437, %v435
    %v522 = vpack.c.b16 %v440, %v438
    %v523 = vpack.c.b16 %v441, %v439
    %v524 = vpack.c.b16 %v444, %v442
    %v525 = vpack.c.b16 %v445, %v443
    %v526 = vpack.c.b16 %v448, %v446
    %v527 = vpack.c.b16 %v449, %v447
    %v528 = vpack.c.b16 %v452, %v450
    %v529 = vpack.c.b16 %v453, %v451
    %v530 = vpack.c.b16 %v456, %v454
    %v531 = vpack.c.b16 %v457, %v455
    %v532 = vpack.c.b16 %v460, %v458
    %v533 = vpack.c.b16 %v461, %v459
    %v534 = vpack.c.b16 %v464, %v462
    %v535 = vpack.c.b16 %v465, %v463
    %v536 = vpack.c.b16 %v468, %v466
    %v537 = vpack.c.b16 %v469, %v467
    %v538 = vpack.c.b16 %v472, %v470
    %v539 = vpack.c.b16 %v473, %v471
    %v540 = vpack.c.b16 %v476, %v474
    %v541 = vpack.c.b16 %v477, %v475
    %v542 = vpack.c.b16 %v480, %v478
    %v543 = vpack.c.b16 %v481, %v479
    %v544 = vpack.c.b16 %v484, %v482
    %v545 = vpack.c.b16 %v485, %v483
    %v546 = vpack.c.b16 %v488, %v486
    %v547 = vpack.c.b16 %v489, %v487
    %v548 = vpack.c.b16 %v492, %v490
    %v549 = vpack.c.b16 %v493, %v491
    %v550 = vpack.c.b16 %v496, %v494
    %v551 = vpack.c.b16 %v497, %v495
    %v552 = vpack.c.b16 %v500, %v498
    %v553 = vpack.c.b16 %v501, %v499
    %v554 = vpack.c.b16 %v504, %v502
    %v555 = vpack.c.b16 %v505, %v503
    %v556 = vpack.c.b16 %v508, %v506
    %v557 = vpack.c.b16 %v509, %v507
    %606 = vmatprep.subr.bf16.mxu0 %v511
    %607 = vmatpush1.bf16.msra.mxu0 %v510
    %608 = vmatprep.subr.bf16.mxu0 %v513
    %609 = vmatpush1.bf16.msra.mxu0 %v512
    %610 = vmatprep.subr.bf16.mxu0 %v515
    %611 = vmatpush1.bf16.msra.mxu0 %v514
    %612 = vmatprep.subr.bf16.mxu0 %v517
    %613 = vmatpush1.bf16.msra.mxu0 %v516
    %614 = vmatprep.subr.bf16.mxu0 %v519
    %615 = vmatpush1.bf16.msra.mxu0 %v518
    %616 = vmatprep.subr.bf16.mxu0 %v521
    %617 = vmatpush1.bf16.msra.mxu0 %v520
    %618 = vmatprep.subr.bf16.mxu0 %v523
    %619 = vmatpush1.bf16.msra.mxu0 %v522
    %620 = vmatprep.subr.bf16.mxu0 %v525
    %621 = vmatpush1.bf16.msra.mxu0 %v524
    %622 = vmatprep.subr.bf16.mxu0 %v527
    %623 = vmatpush1.bf16.msra.mxu0 %v526
    %624 = vmatprep.subr.bf16.mxu0 %v529
    %625 = vmatpush1.bf16.msra.mxu0 %v528
    %626 = vmatprep.subr.bf16.mxu0 %v531
    %627 = vmatpush1.bf16.msra.mxu0 %v530
    %628 = vmatprep.subr.bf16.mxu0 %v533
    %629 = vmatpush1.bf16.msra.mxu0 %v532
    %630 = vmatprep.subr.bf16.mxu0 %v535
    %631 = vmatpush1.bf16.msra.mxu0 %v534
    %632 = vmatprep.subr.bf16.mxu0 %v537
    %633 = vmatpush1.bf16.msra.mxu0 %v536
    %634 = vmatprep.subr.bf16.mxu0 %v539
    %635 = vmatpush1.bf16.msra.mxu0 %v538
    %636 = vmatprep.subr.bf16.mxu0 %v541
    %637 = vmatpush1.bf16.msra.mxu0 %v540
    %638 = vmatprep.mubr.bf16.mxu0 %v265
    %639 = vmatmul.mubr.bf16.gmra.mrb[0].mxu0 %v264
    %v640 = vpop.f32.mrb[0].mxu0
    %v641 = vadd.f32 0.0, %v640
    %v642 = vpop.f32.mrb[0].mxu0
    %v643 = vadd.f32 0.0, %v642
    %v644 = vpop.f32.mrb[0].mxu0
    %v645 = vadd.f32 0.0, %v644
    %v646 = vpop.f32.mrb[0].mxu0
    %v647 = vadd.f32 0.0, %v646
    %648 = vmatprep.mubr.bf16.mxu0 %v268
    %649 = vmatmul.mubr.bf16.gmra.mrb[0].mxu0 %v267
    %v650 = vpop.f32.mrb[0].mxu0
    %v651 = vadd.f32 0.0, %v650
    %v652 = vpop.f32.mrb[0].mxu0
    %v653 = vadd.f32 0.0, %v652
    %v654 = vpop.f32.mrb[0].mxu0
    %v655 = vadd.f32 0.0, %v654
    %v656 = vpop.f32.mrb[0].mxu0
    %v657 = vadd.f32 0.0, %v656
    %658 = vdwg.mxu0
    %659 = vmatprep.subr.bf16.mxu0 %v543
    %660 = vmatpush1.bf16.msra.mxu0 %v542
    %661 = vmatprep.subr.bf16.mxu0 %v545
    %662 = vmatpush1.bf16.msra.mxu0 %v544
    %663 = vmatprep.subr.bf16.mxu0 %v547
    %664 = vmatpush1.bf16.msra.mxu0 %v546
    %665 = vmatprep.subr.bf16.mxu0 %v549
    %666 = vmatpush1.bf16.msra.mxu0 %v548
    %667 = vmatprep.subr.bf16.mxu0 %v551
    %668 = vmatpush1.bf16.msra.mxu0 %v550
    %669 = vmatprep.subr.bf16.mxu0 %v553
    %670 = vmatpush1.bf16.msra.mxu0 %v552
    %671 = vmatprep.subr.bf16.mxu0 %v555
    %672 = vmatpush1.bf16.msra.mxu0 %v554
    %673 = vmatprep.subr.bf16.mxu0 %v557
    %674 = vmatpush1.bf16.msra.mxu0 %v556
    %675 = vmatprep.subr.bf16.mxu0 0
    %676 = vmatpush1.bf16.msra.mxu0 0
    %677 = vmatprep.subr.bf16.mxu0 0
    %678 = vmatpush1.bf16.msra.mxu0 0
    %679 = vmatprep.subr.bf16.mxu0 0
    %680 = vmatpush1.bf16.msra.mxu0 0
    %681 = vmatprep.subr.bf16.mxu0 0
    %682 = vmatpush1.bf16.msra.mxu0 0
    %683 = vmatprep.subr.bf16.mxu0 0
    %684 = vmatpush1.bf16.msra.mxu0 0
    %685 = vmatprep.subr.bf16.mxu0 0
    %686 = vmatpush1.bf16.msra.mxu0 0
    %687 = vmatprep.subr.bf16.mxu0 0
    %688 = vmatpush1.bf16.msra.mxu0 0
    %689 = vmatprep.subr.bf16.mxu0 0
    %690 = vmatpush1.bf16.msra.mxu0 0
    %691 = vmatprep.mubr.bf16.mxu0 0
    %692 = vmatmul.mubr.bf16.gmra.mrb[0].mxu0 %v266
    %v693 = vpop.f32.mrb[0].mxu0
    %v694 = vadd.f32 %v641, %v693
    %v695 = vpop.f32.mrb[0].mxu0
    %v696 = vadd.f32 %v643, %v695
    %v697 = vpop.f32.mrb[0].mxu0
    %v698 = vadd.f32 %v645, %v697
    %v699 = vpop.f32.mrb[0].mxu0
    %v700 = vadd.f32 %v647, %v699
    %701 = vmatprep.mubr.bf16.mxu0 0
    %702 = vmatmul.mubr.bf16.gmra.mrb[0].mxu0 %v269
    %v703 = vpop.f32.mrb[0].mxu0
    %v704 = vadd.f32 %v651, %v703
    %v705 = vpop.f32.mrb[0].mxu0
    %v706 = vadd.f32 %v653, %v705
    %v707 = vpop.f32.mrb[0].mxu0
    %v708 = vadd.f32 %v655, %v707
    %v709 = vpop.f32.mrb[0].mxu0
    %v710 = vadd.f32 %v657, %v709
    %711 = vdwg.mxu0
    %v712 = vld [vmem:[%s5] sm:$0x7]
    %v714 = vlaneseq
    %v715 = vshrl.u32 %v714, 7
    %v716 = vsub.s32 0, %v715
    %v717 = vrot.slane %v712, %v716
    %v718 = vlaneseq
    %v719 = vshrl.u32 %v718, 7
    %v720 = vsub.s32 1, %v719
    %v721 = vrot.slane %v712, %v720
    %v722 = vlaneseq
    %v723 = vshrl.u32 %v722, 7
    %v724 = vsub.s32 2, %v723
    %v725 = vrot.slane %v712, %v724
    %v777 = vunpack.c.l.b16 %v270
    %v778 = vunpack.c.h.b16 %v270
    %v779 = vunpack.c.l.b16 %v271
    %v780 = vunpack.c.l.b16 %v272
    %v781 = vunpack.c.h.b16 %v272
    %v782 = vunpack.c.l.b16 %v273
    %v783 = vunpack.c.l.b16 %v274
    %v784 = vunpack.c.h.b16 %v274
    %v785 = vunpack.c.l.b16 %v275
    %v786 = vunpack.c.l.b16 %v276
    %v787 = vunpack.c.h.b16 %v276
    %v788 = vunpack.c.l.b16 %v277
    %v789 = vunpack.c.l.b16 %v278
    %v790 = vunpack.c.h.b16 %v278
    %v791 = vunpack.c.l.b16 %v279
    %v792 = vunpack.c.l.b16 %v280
    %v793 = vunpack.c.h.b16 %v280
    %v794 = vunpack.c.l.b16 %v281
    %v795 = vunpack.c.l.b16 %v282
    %v796 = vunpack.c.h.b16 %v282
    %v797 = vunpack.c.l.b16 %v283
    %v798 = vunpack.c.l.b16 %v284
    %v799 = vunpack.c.h.b16 %v284
    %v800 = vunpack.c.l.b16 %v285
    %v801 = vunpack.c.l.b16 %v286
    %v802 = vunpack.c.h.b16 %v286
    %v803 = vunpack.c.l.b16 %v287
    %v804 = vunpack.c.l.b16 %v288
    %v805 = vunpack.c.h.b16 %v288
    %v806 = vunpack.c.l.b16 %v289
    %v807 = vunpack.c.l.b16 %v290
    %v808 = vunpack.c.h.b16 %v290
    %v809 = vunpack.c.l.b16 %v291
    %v810 = vunpack.c.l.b16 %v292
    %v811 = vunpack.c.h.b16 %v292
    %v812 = vunpack.c.l.b16 %v293
    %v813 = vunpack.c.l.b16 %v294
    %v814 = vunpack.c.h.b16 %v294
    %v815 = vunpack.c.l.b16 %v295
    %v816 = vunpack.c.l.b16 %v296
    %v817 = vunpack.c.h.b16 %v296
    %v818 = vunpack.c.l.b16 %v297
    %v819 = vunpack.c.l.b16 %v298
    %v820 = vunpack.c.h.b16 %v298
    %v821 = vunpack.c.l.b16 %v299
    %v822 = vunpack.c.l.b16 %v300
    %v823 = vunpack.c.h.b16 %v300
    %v824 = vunpack.c.l.b16 %v301
    %v825 = vunpack.c.l.b16 %v302
    %v826 = vunpack.c.h.b16 %v302
    %v827 = vunpack.c.l.b16 %v303
    %v828 = vunpack.c.l.b16 %v304
    %v829 = vunpack.c.h.b16 %v304
    %v830 = vunpack.c.l.b16 %v305
    %v831 = vunpack.c.l.b16 %v306
    %v832 = vunpack.c.h.b16 %v306
    %v833 = vunpack.c.l.b16 %v307
    %v834 = vunpack.c.l.b16 %v308
    %v835 = vunpack.c.h.b16 %v308
    %v836 = vunpack.c.l.b16 %v309
    %v837 = vunpack.c.l.b16 %v310
    %v838 = vunpack.c.h.b16 %v310
    %v839 = vunpack.c.l.b16 %v311
    %v840 = vunpack.c.l.b16 %v312
    %v841 = vunpack.c.h.b16 %v312
    %v842 = vunpack.c.l.b16 %v313
    %v843 = vunpack.c.l.b16 %v314
    %v844 = vunpack.c.h.b16 %v314
    %v845 = vunpack.c.l.b16 %v315
    %v846 = vunpack.c.l.b16 %v316
    %v847 = vunpack.c.h.b16 %v316
    %v848 = vunpack.c.l.b16 %v317
    %v849 = vpack.c.b16 %v780, %v777
    %v850 = vpack.c.b16 %v781, %v778
    %v851 = vpack.c.b16 %v782, %v779
    %v852 = vpack.c.b16 %v786, %v783
    %v853 = vpack.c.b16 %v787, %v784
    %v854 = vpack.c.b16 %v788, %v785
    %v855 = vpack.c.b16 %v792, %v789
    %v856 = vpack.c.b16 %v793, %v790
    %v857 = vpack.c.b16 %v794, %v791
    %v858 = vpack.c.b16 %v798, %v795
    %v859 = vpack.c.b16 %v799, %v796
    %v860 = vpack.c.b16 %v800, %v797
    %v861 = vpack.c.b16 %v804, %v801
    %v862 = vpack.c.b16 %v805, %v802
    %v863 = vpack.c.b16 %v806, %v803
    %v864 = vpack.c.b16 %v810, %v807
    %v865 = vpack.c.b16 %v811, %v808
    %v866 = vpack.c.b16 %v812, %v809
    %v867 = vpack.c.b16 %v816, %v813
    %v868 = vpack.c.b16 %v817, %v814
    %v869 = vpack.c.b16 %v818, %v815
    %v870 = vpack.c.b16 %v822, %v819
    %v871 = vpack.c.b16 %v823, %v820
    %v872 = vpack.c.b16 %v824, %v821
    %v873 = vpack.c.b16 %v828, %v825
    %v874 = vpack.c.b16 %v829, %v826
    %v875 = vpack.c.b16 %v830, %v827
    %v876 = vpack.c.b16 %v834, %v831
    %v877 = vpack.c.b16 %v835, %v832
    %v878 = vpack.c.b16 %v836, %v833
    %v879 = vpack.c.b16 %v840, %v837
    %v880 = vpack.c.b16 %v841, %v838
    %v881 = vpack.c.b16 %v842, %v839
    %v882 = vpack.c.b16 %v846, %v843
    %v883 = vpack.c.b16 %v847, %v844
    %v884 = vpack.c.b16 %v848, %v845
    %v922 = vsel %vm231, %v237, 0
    %v925 = vsel %vm231, %v239, 0
    %927 = vmatprep.subr.bf16.mxu0 %v850
    %928 = vmatpush1.bf16.msra.mxu0 %v849
    %929 = vmatprep.subr.bf16.mxu0 %v853
    %930 = vmatpush1.bf16.msra.mxu0 %v852
    %931 = vmatprep.subr.bf16.mxu0 %v856
    %932 = vmatpush1.bf16.msra.mxu0 %v855
    %933 = vmatprep.subr.bf16.mxu0 %v859
    %934 = vmatpush1.bf16.msra.mxu0 %v858
    %935 = vmatprep.subr.bf16.mxu0 %v862
    %936 = vmatpush1.bf16.msra.mxu0 %v861
    %937 = vmatprep.subr.bf16.mxu0 %v865
    %938 = vmatpush1.bf16.msra.mxu0 %v864
    %939 = vmatprep.subr.bf16.mxu0 %v868
    %940 = vmatpush1.bf16.msra.mxu0 %v867
    %941 = vmatprep.subr.bf16.mxu0 %v871
    %942 = vmatpush1.bf16.msra.mxu0 %v870
    %943 = vmatprep.subr.bf16.mxu0 %v874
    %944 = vmatpush1.bf16.msra.mxu0 %v873
    %945 = vmatprep.subr.bf16.mxu0 %v877
    %946 = vmatpush1.bf16.msra.mxu0 %v876
    %947 = vmatprep.subr.bf16.mxu0 %v880
    %948 = vmatpush1.bf16.msra.mxu0 %v879
    %949 = vmatprep.subr.bf16.mxu0 %v883
    %950 = vmatpush1.bf16.msra.mxu0 %v882
    %951 = vmatprep.subr.bf16.mxu0 0
    %952 = vmatpush1.bf16.msra.mxu0 0
    %953 = vmatprep.subr.bf16.mxu0 0
    %954 = vmatpush1.bf16.msra.mxu0 0
    %955 = vmatprep.subr.bf16.mxu0 0
    %956 = vmatpush1.bf16.msra.mxu0 0
    %957 = vmatprep.subr.bf16.mxu0 0
    %958 = vmatpush1.bf16.msra.mxu0 0
    %959 = vmatprep.mubr.bf16.mxu0 %v922
    %960 = vmatmul.mubr.bf16.gmra.mrb[0].mxu0 %v236
    %v961 = vpop.f32.mrb[0].mxu0
    %v962 = vadd.f32 %v717, %v961
    %v963 = vpop.f32.mrb[0].mxu0
    %v964 = vadd.f32 %v721, %v963
    %v965 = vpop.f32.mrb[0].mxu0
    %v966 = vadd.f32 %v717, %v965
    %v967 = vpop.f32.mrb[0].mxu0
    %v968 = vadd.f32 %v721, %v967
    %969 = vmatprep.mubr.bf16.mxu0 %v925
    %970 = vmatmul.mubr.bf16.gmra.mrb[0].mxu0 %v238
    %v971 = vpop.f32.mrb[0].mxu0
    %v972 = vadd.f32 %v717, %v971
    %v973 = vpop.f32.mrb[0].mxu0
    %v974 = vadd.f32 %v721, %v973
    %v975 = vpop.f32.mrb[0].mxu0
    %v976 = vadd.f32 %v717, %v975
    %v977 = vpop.f32.mrb[0].mxu0
    %v978 = vadd.f32 %v721, %v977
    %979 = vdwg.mxu0
    %980 = vmatprep.subr.bf16.mxu0 0
    %981 = vmatpush1.bf16.msra.mxu0 %v851
    %982 = vmatprep.subr.bf16.mxu0 0
    %983 = vmatpush1.bf16.msra.mxu0 %v854
    %984 = vmatprep.subr.bf16.mxu0 0
    %985 = vmatpush1.bf16.msra.mxu0 %v857
    %986 = vmatprep.subr.bf16.mxu0 0
    %987 = vmatpush1.bf16.msra.mxu0 %v860
    %988 = vmatprep.subr.bf16.mxu0 0
    %989 = vmatpush1.bf16.msra.mxu0 %v863
    %990 = vmatprep.subr.bf16.mxu0 0
    %991 = vmatpush1.bf16.msra.mxu0 %v866
    %992 = vmatprep.subr.bf16.mxu0 0
    %993 = vmatpush1.bf16.msra.mxu0 %v869
    %994 = vmatprep.subr.bf16.mxu0 0
    %995 = vmatpush1.bf16.msra.mxu0 %v872
    %996 = vmatprep.subr.bf16.mxu0 0
    %997 = vmatpush1.bf16.msra.mxu0 %v875
    %998 = vmatprep.subr.bf16.mxu0 0
    %999 = vmatpush1.bf16.msra.mxu0 %v878
    %1000 = vmatprep.subr.bf16.mxu0 0
    %1001 = vmatpush1.bf16.msra.mxu0 %v881
    %1002 = vmatprep.subr.bf16.mxu0 0
    %1003 = vmatpush1.bf16.msra.mxu0 %v884
    %1004 = vmatprep.subr.bf16.mxu0 0
    %1005 = vmatpush1.bf16.msra.mxu0 0
    %1006 = vmatprep.subr.bf16.mxu0 0
    %1007 = vmatpush1.bf16.msra.mxu0 0
    %1008 = vmatprep.subr.bf16.mxu0 0
    %1009 = vmatpush1.bf16.msra.mxu0 0
    %1010 = vmatprep.subr.bf16.mxu0 0
    %1011 = vmatpush1.bf16.msra.mxu0 0
    %1012 = vmatprep.mubr.bf16.mxu0 %v922
    %1013 = vmatmul.mubr.bf16.gmra.mrb[0].mxu0 %v236
    %v1014 = vpop.f32.mrb[0].mxu0
    %v1015 = vadd.f32 %v725, %v1014
    %v1016 = vpop.f32.mrb[0].mxu0
    %v1017 = vpop.f32.mrb[0].mxu0
    %v1018 = vadd.f32 %v725, %v1017
    %v1019 = vpop.f32.mrb[0].mxu0
    %1020 = vmatprep.mubr.bf16.mxu0 %v925
    %1021 = vmatmul.mubr.bf16.gmra.mrb[0].mxu0 %v238
    %v1022 = vpop.f32.mrb[0].mxu0
    %v1023 = vadd.f32 %v725, %v1022
    %v1024 = vpop.f32.mrb[0].mxu0
    %v1025 = vpop.f32.mrb[0].mxu0
    %v1026 = vadd.f32 %v725, %v1025
    %v1027 = vpop.f32.mrb[0].mxu0
    %1028 = vdwg.mxu0
    %v1029 = vadd.f32 %v962, %v694
    %v1030 = vadd.f32 %v964, %v696
    %v1031 = vadd.f32 %v966, %v698
    %v1032 = vadd.f32 %v968, %v700
    %v1033 = vadd.f32 %v972, %v704
    %v1034 = vadd.f32 %v974, %v706
    %v1035 = vadd.f32 %v976, %v708
    %v1036 = vadd.f32 %v978, %v710
    %v1037 = vxor.u32 %v1029, 2147483648
    %v1038 = vxor.u32 %v1030, 2147483648
    %v1039 = vxor.u32 %v1031, 2147483648
    %v1040 = vxor.u32 %v1032, 2147483648
    %v1041 = vxor.u32 %v1033, 2147483648
    %v1042 = vxor.u32 %v1034, 2147483648
    %v1043 = vxor.u32 %v1035, 2147483648
    %v1044 = vxor.u32 %v1036, 2147483648
    %v1045 = vmul.f32 %v1037, 1.442695
    %v1046 = vpow.pop %v1045
    %v1047 = vmul.f32 %v1038, 1.442695
    %v1048 = vpow.pop %v1047
    %v1049 = vmul.f32 %v1039, 1.442695
    %v1050 = vpow.pop %v1049
    %v1051 = vmul.f32 %v1040, 1.442695
    %v1052 = vpow.pop %v1051
    %v1053 = vmul.f32 %v1041, 1.442695
    %v1054 = vpow.pop %v1053
    %v1055 = vmul.f32 %v1042, 1.442695
    %v1056 = vpow.pop %v1055
    %v1057 = vmul.f32 %v1043, 1.442695
    %v1058 = vpow.pop %v1057
    %v1059 = vmul.f32 %v1044, 1.442695
    %v1060 = vpow.pop %v1059
    %v1061 = vadd.f32 %v1046, 1.0
    %v1062 = vadd.f32 %v1048, 1.0
    %v1063 = vadd.f32 %v1050, 1.0
    %v1064 = vadd.f32 %v1052, 1.0
    %v1065 = vadd.f32 %v1054, 1.0
    %v1066 = vadd.f32 %v1056, 1.0
    %v1067 = vadd.f32 %v1058, 1.0
    %v1068 = vadd.f32 %v1060, 1.0
    %v1069 = vrcp.pop %v1061
    %v1070 = vmul.f32 1.0, %v1069
    %v1071 = vrcp.pop %v1062
    %v1072 = vmul.f32 1.0, %v1071
    %v1073 = vrcp.pop %v1063
    %v1074 = vmul.f32 1.0, %v1073
    %v1075 = vrcp.pop %v1064
    %v1076 = vmul.f32 1.0, %v1075
    %v1077 = vrcp.pop %v1065
    %v1078 = vmul.f32 1.0, %v1077
    %v1079 = vrcp.pop %v1066
    %v1080 = vmul.f32 1.0, %v1079
    %v1081 = vrcp.pop %v1067
    %v1082 = vmul.f32 1.0, %v1081
    %v1083 = vrcp.pop %v1068
    %v1084 = vmul.f32 1.0, %v1083
    %v1085 = vmul.f32 %v1072, %v84
    %v1086 = vmul.f32 %v1076, %v85
    %v1087 = vmul.f32 %v1080, %v86
    %v1088 = vmul.f32 %v1084, %v87
    %v1089 = vrot.slane %v1085, 7
    %v1090 = vrot.slane %v1086, 7
    %v1091 = vrot.slane %v1087, 7
    %v1092 = vrot.slane %v1088, 7
    %v1093 = vsel %vm145, %v1091, %v1092
    %v1094 = vsel %vm145, %v1090, %v1091
    %v1095 = vsel %vm145, %v1089, %v1090
    %v1096 = vsel %vm145, %v1092, %v1089
    %v1097 = vsel %vm170, %v1096, 0.0
    %v1098 = vsel %vm171, %v1095, 0.0
    %v1099 = vsel %vm172, %v1094, 0.0
    %v1100 = vsel %vm173, %v1093, 0.0
    %v1101 = vrot.slane %v1085, 1
    %v1102 = vrot.slane %v1086, 1
    %v1103 = vrot.slane %v1087, 1
    %v1104 = vrot.slane %v1088, 1
    %v1105 = vsel %vm182, %v1103, %v1104
    %v1106 = vsel %vm182, %v1102, %v1103
    %v1107 = vsel %vm182, %v1101, %v1102
    %v1108 = vsel %vm182, %v1104, %v1101
    %v1109 = vsel %vm207, %v1107, 0.0
    %v1110 = vsel %vm208, %v1106, 0.0
    %v1111 = vsel %vm209, %v1105, 0.0
    %v1112 = vsel %vm210, %v1108, 0.0
    %v1113 = vpack.c.bf16 %v1098, %v1097
    %v1114 = vpack.c.bf16 %v1086, %v1085
    %v1115 = vpack.c.bf16 %v1110, %v1109
    %v1116 = vpack.c.bf16 %v1100, %v1099
    %v1117 = vpack.c.bf16 %v1088, %v1087
    %v1118 = vpack.c.bf16 %v1112, %v1111
    %v1119 = vld [vmem:[#allocation8] sm:$0xf]
    %v1120 = vld [vmem:[#allocation8 + $0x4] sm:$0xf]
    %v1121 = vld [vmem:[#allocation8 + $0x8] sm:$0xf]
    %v1122 = vld [vmem:[#allocation8 + $0xc] sm:$0xf]
    %v1123 = vld [vmem:[#allocation8 + $0x10] sm:$0xf]
    %v1124 = vld [vmem:[#allocation8 + $0x14] sm:$0xf]
    %v1125 = vld [vmem:[#allocation8 + $0x18] sm:$0xf]
    %v1126 = vld [vmem:[#allocation8 + $0x1c] sm:$0xf]
    %v1127 = vld [vmem:[#allocation8 + $0x20] sm:$0xf]
    %v1128 = vld [vmem:[#allocation8 + $0x24] sm:$0xf]
    %v1129 = vld [vmem:[#allocation8 + $0x28] sm:$0xf]
    %v1130 = vld [vmem:[#allocation8 + $0x2c] sm:$0xf]
    %v1131 = vld [vmem:[#allocation8 + $0x30] sm:$0xf]
    %v1132 = vld [vmem:[#allocation8 + $0x34] sm:$0xf]
    %v1133 = vld [vmem:[#allocation8 + $0x38] sm:$0xf]
    %v1134 = vld [vmem:[#allocation8 + $0x3c] sm:$0xf]
    %v1135 = vld [vmem:[#allocation8 + $0x40] sm:$0xf]
    %v1136 = vld [vmem:[#allocation8 + $0x44] sm:$0xf]
    %v1137 = vld [vmem:[#allocation8 + $0x48] sm:$0xf]
    %v1138 = vld [vmem:[#allocation8 + $0x4c] sm:$0xf]
    %v1139 = vld [vmem:[#allocation8 + $0x50] sm:$0xf]
    %v1140 = vld [vmem:[#allocation8 + $0x54] sm:$0xf]
    %v1141 = vld [vmem:[#allocation8 + $0x58] sm:$0xf]
    %v1142 = vld [vmem:[#allocation8 + $0x5c] sm:$0xf]
    %v1143 = vld [vmem:[#allocation8 + $0x60] sm:$0xf]
    %v1144 = vld [vmem:[#allocation8 + $0x64] sm:$0xf]
    %v1145 = vld [vmem:[#allocation8 + $0x68] sm:$0xf]
    %v1146 = vld [vmem:[#allocation8 + $0x6c] sm:$0xf]
    %v1147 = vld [vmem:[#allocation8 + $0x70] sm:$0xf]
    %v1148 = vld [vmem:[#allocation8 + $0x74] sm:$0xf]
    %v1149 = vld [vmem:[#allocation8 + $0x78] sm:$0xf]
    %v1150 = vld [vmem:[#allocation8 + $0x7c] sm:$0xf]
    %v1151 = vld [vmem:[#allocation8 + $0x80] sm:$0xf]
    %v1152 = vld [vmem:[#allocation8 + $0x84] sm:$0xf]
    %v1153 = vld [vmem:[#allocation8 + $0x88] sm:$0xf]
    %v1154 = vld [vmem:[#allocation8 + $0x8c] sm:$0xf]
    %v1155 = vld [vmem:[#allocation8 + $0x90] sm:$0xf]
    %v1156 = vld [vmem:[#allocation8 + $0x94] sm:$0xf]
    %v1157 = vld [vmem:[#allocation8 + $0x98] sm:$0xf]
    %v1158 = vld [vmem:[#allocation8 + $0x9c] sm:$0xf]
    %v1159 = vld [vmem:[#allocation8 + $0xa0] sm:$0xf]
    %v1160 = vld [vmem:[#allocation8 + $0xa4] sm:$0xf]
    %v1161 = vld [vmem:[#allocation8 + $0xa8] sm:$0xf]
    %v1162 = vld [vmem:[#allocation8 + $0xac] sm:$0xf]
    %v1163 = vld [vmem:[#allocation8 + $0xb0] sm:$0xf]
    %v1164 = vld [vmem:[#allocation8 + $0xb4] sm:$0xf]
    %v1165 = vld [vmem:[#allocation8 + $0xb8] sm:$0xf]
    %v1166 = vld [vmem:[#allocation8 + $0xbc] sm:$0xf]
    %v1215 = vunpack.c.l.b16 %v1119
    %v1216 = vunpack.c.l.b16 %v1120
    %v1217 = vunpack.c.l.b16 %v1121
    %v1218 = vunpack.c.l.b16 %v1122
    %v1219 = vunpack.c.l.b16 %v1123
    %v1220 = vunpack.c.l.b16 %v1124
    %v1221 = vunpack.c.l.b16 %v1125
    %v1222 = vunpack.c.l.b16 %v1126
    %v1223 = vunpack.c.l.b16 %v1127
    %v1224 = vunpack.c.l.b16 %v1128
    %v1225 = vunpack.c.l.b16 %v1129
    %v1226 = vunpack.c.l.b16 %v1130
    %v1227 = vunpack.c.l.b16 %v1131
    %v1228 = vunpack.c.l.b16 %v1132
    %v1229 = vunpack.c.l.b16 %v1133
    %v1230 = vunpack.c.l.b16 %v1134
    %v1231 = vunpack.c.l.b16 %v1135
    %v1232 = vunpack.c.l.b16 %v1136
    %v1233 = vunpack.c.l.b16 %v1137
    %v1234 = vunpack.c.l.b16 %v1138
    %v1235 = vunpack.c.l.b16 %v1139
    %v1236 = vunpack.c.l.b16 %v1140
    %v1237 = vunpack.c.l.b16 %v1141
    %v1238 = vunpack.c.l.b16 %v1142
    %v1239 = vunpack.c.l.b16 %v1143
    %v1240 = vunpack.c.l.b16 %v1144
    %v1241 = vunpack.c.l.b16 %v1145
    %v1242 = vunpack.c.l.b16 %v1146
    %v1243 = vunpack.c.l.b16 %v1147
    %v1244 = vunpack.c.l.b16 %v1148
    %v1245 = vunpack.c.l.b16 %v1149
    %v1246 = vunpack.c.l.b16 %v1150
    %v1247 = vunpack.c.l.b16 %v1151
    %v1248 = vunpack.c.l.b16 %v1152
    %v1249 = vunpack.c.l.b16 %v1153
    %v1250 = vunpack.c.l.b16 %v1154
    %v1251 = vunpack.c.l.b16 %v1155
    %v1252 = vunpack.c.l.b16 %v1156
    %v1253 = vunpack.c.l.b16 %v1157
    %v1254 = vunpack.c.l.b16 %v1158
    %v1255 = vunpack.c.l.b16 %v1159
    %v1256 = vunpack.c.l.b16 %v1160
    %v1257 = vunpack.c.l.b16 %v1161
    %v1258 = vunpack.c.l.b16 %v1162
    %v1259 = vunpack.c.l.b16 %v1163
    %v1260 = vunpack.c.l.b16 %v1164
    %v1261 = vunpack.c.l.b16 %v1165
    %v1262 = vunpack.c.l.b16 %v1166
    %v1263 = vpack.c.b16 %v1216, %v1215
    %v1264 = vpack.c.b16 %v1218, %v1217
    %v1265 = vpack.c.b16 %v1220, %v1219
    %v1266 = vpack.c.b16 %v1222, %v1221
    %v1267 = vpack.c.b16 %v1224, %v1223
    %v1268 = vpack.c.b16 %v1226, %v1225
    %v1269 = vpack.c.b16 %v1228, %v1227
    %v1270 = vpack.c.b16 %v1230, %v1229
    %v1271 = vpack.c.b16 %v1232, %v1231
    %v1272 = vpack.c.b16 %v1234, %v1233
    %v1273 = vpack.c.b16 %v1236, %v1235
    %v1274 = vpack.c.b16 %v1238, %v1237
    %v1275 = vpack.c.b16 %v1240, %v1239
    %v1276 = vpack.c.b16 %v1242, %v1241
    %v1277 = vpack.c.b16 %v1244, %v1243
    %v1278 = vpack.c.b16 %v1246, %v1245
    %v1279 = vpack.c.b16 %v1248, %v1247
    %v1280 = vpack.c.b16 %v1250, %v1249
    %v1281 = vpack.c.b16 %v1252, %v1251
    %v1282 = vpack.c.b16 %v1254, %v1253
    %v1283 = vpack.c.b16 %v1256, %v1255
    %v1284 = vpack.c.b16 %v1258, %v1257
    %v1285 = vpack.c.b16 %v1260, %v1259
    %v1286 = vpack.c.b16 %v1262, %v1261
    %1311 = vmatprep.subr.bf16.mxu0 0
    %1312 = vmatpush1.bf16.msra.mxu0 %v1263
    %1313 = vmatprep.subr.bf16.mxu0 0
    %1314 = vmatpush1.bf16.msra.mxu0 %v1264
    %1315 = vmatprep.subr.bf16.mxu0 0
    %1316 = vmatpush1.bf16.msra.mxu0 %v1265
    %1317 = vmatprep.subr.bf16.mxu0 0
    %1318 = vmatpush1.bf16.msra.mxu0 %v1266
    %1319 = vmatprep.subr.bf16.mxu0 0
    %1320 = vmatpush1.bf16.msra.mxu0 %v1267
    %1321 = vmatprep.subr.bf16.mxu0 0
    %1322 = vmatpush1.bf16.msra.mxu0 %v1268
    %1323 = vmatprep.subr.bf16.mxu0 0
    %1324 = vmatpush1.bf16.msra.mxu0 %v1269
    %1325 = vmatprep.subr.bf16.mxu0 0
    %1326 = vmatpush1.bf16.msra.mxu0 %v1270
    %1327 = vmatprep.subr.bf16.mxu0 0
    %1328 = vmatpush1.bf16.msra.mxu0 %v1271
    %1329 = vmatprep.subr.bf16.mxu0 0
    %1330 = vmatpush1.bf16.msra.mxu0 %v1272
    %1331 = vmatprep.subr.bf16.mxu0 0
    %1332 = vmatpush1.bf16.msra.mxu0 %v1273
    %1333 = vmatprep.subr.bf16.mxu0 0
    %1334 = vmatpush1.bf16.msra.mxu0 %v1274
    %1335 = vmatprep.subr.bf16.mxu0 0
    %1336 = vmatpush1.bf16.msra.mxu0 %v1275
    %1337 = vmatprep.subr.bf16.mxu0 0
    %1338 = vmatpush1.bf16.msra.mxu0 %v1276
    %1339 = vmatprep.subr.bf16.mxu0 0
    %1340 = vmatpush1.bf16.msra.mxu0 %v1277
    %1341 = vmatprep.subr.bf16.mxu0 0
    %1342 = vmatpush1.bf16.msra.mxu0 %v1278
    %1343 = vmatprep.mubr.bf16.mxu0 %v1114
    %1344 = vmatmul.mubr.bf16.gmra.mrb[0].mxu0 %v1113
    %v1345 = vpop.f32.mrb[0].mxu0
    %v1346 = vadd.f32 0.0, %v1345
    %v1347 = vpop.f32.mrb[0].mxu0
    %v1348 = vpop.f32.mrb[0].mxu0
    %v1349 = vadd.f32 0.0, %v1348
    %v1350 = vpop.f32.mrb[0].mxu0
    %1351 = vmatprep.mubr.bf16.mxu0 %v1117
    %1352 = vmatmul.mubr.bf16.gmra.mrb[0].mxu0 %v1116
    %v1353 = vpop.f32.mrb[0].mxu0
    %v1354 = vadd.f32 0.0, %v1353
    %v1355 = vpop.f32.mrb[0].mxu0
    %v1356 = vpop.f32.mrb[0].mxu0
    %v1357 = vadd.f32 0.0, %v1356
    %v1358 = vpop.f32.mrb[0].mxu0
    %1359 = vdwg.mxu0
    %1360 = vmatprep.subr.bf16.mxu0 0
    %1361 = vmatpush1.bf16.msra.mxu0 %v1279
    %1362 = vmatprep.subr.bf16.mxu0 0
    %1363 = vmatpush1.bf16.msra.mxu0 %v1280
    %1364 = vmatprep.subr.bf16.mxu0 0
    %1365 = vmatpush1.bf16.msra.mxu0 %v1281
    %1366 = vmatprep.subr.bf16.mxu0 0
    %1367 = vmatpush1.bf16.msra.mxu0 %v1282
    %1368 = vmatprep.subr.bf16.mxu0 0
    %1369 = vmatpush1.bf16.msra.mxu0 %v1283
    %1370 = vmatprep.subr.bf16.mxu0 0
    %1371 = vmatpush1.bf16.msra.mxu0 %v1284
    %1372 = vmatprep.subr.bf16.mxu0 0
    %1373 = vmatpush1.bf16.msra.mxu0 %v1285
    %1374 = vmatprep.subr.bf16.mxu0 0
    %1375 = vmatpush1.bf16.msra.mxu0 %v1286
    %1376 = vmatprep.subr.bf16.mxu0 0
    %1377 = vmatpush1.bf16.msra.mxu0 0
    %1378 = vmatprep.subr.bf16.mxu0 0
    %1379 = vmatpush1.bf16.msra.mxu0 0
    %1380 = vmatprep.subr.bf16.mxu0 0
    %1381 = vmatpush1.bf16.msra.mxu0 0
    %1382 = vmatprep.subr.bf16.mxu0 0
    %1383 = vmatpush1.bf16.msra.mxu0 0
    %1384 = vmatprep.subr.bf16.mxu0 0
    %1385 = vmatpush1.bf16.msra.mxu0 0
    %1386 = vmatprep.subr.bf16.mxu0 0
    %1387 = vmatpush1.bf16.msra.mxu0 0
    %1388 = vmatprep.subr.bf16.mxu0 0
    %1389 = vmatpush1.bf16.msra.mxu0 0
    %1390 = vmatprep.subr.bf16.mxu0 0
    %1391 = vmatpush1.bf16.msra.mxu0 0
    %1392 = vmatprep.mubr.bf16.mxu0 0
    %1393 = vmatmul.mubr.bf16.gmra.mrb[0].mxu0 %v1115
    %v1394 = vpop.f32.mrb[0].mxu0
    %v1395 = vadd.f32 %v1346, %v1394
    %v1396 = vpop.f32.mrb[0].mxu0
    %v1397 = vpop.f32.mrb[0].mxu0
    %v1398 = vadd.f32 %v1349, %v1397
    %v1399 = vpop.f32.mrb[0].mxu0
    %1400 = vmatprep.mubr.bf16.mxu0 0
    %1401 = vmatmul.mubr.bf16.gmra.mrb[0].mxu0 %v1118
    %v1402 = vpop.f32.mrb[0].mxu0
    %v1403 = vadd.f32 %v1354, %v1402
    %v1404 = vpop.f32.mrb[0].mxu0
    %v1405 = vpop.f32.mrb[0].mxu0
    %v1406 = vadd.f32 %v1357, %v1405
    %v1407 = vpop.f32.mrb[0].mxu0
    %1408 = vdwg.mxu0
    %v1409 = vadd.f32 %v1015, %v1395
    %v1410 = vadd.f32 %v1018, %v1398
    %v1411 = vadd.f32 %v1023, %v1403
    %v1412 = vadd.f32 %v1026, %v1406
    %v1413 = vmul.f32 %v1409, 0.01
    %v1414 = vmul.f32 %v1410, 0.01
    %v1415 = vmul.f32 %v1411, 0.01
    %v1416 = vmul.f32 %v1412, 0.01
    %v1417 = vmax.f32 %v1409, %v1413
    %v1418 = vmax.f32 %v1410, %v1414
    %v1419 = vmax.f32 %v1411, %v1415
    %v1420 = vmax.f32 %v1412, %v1416
    %v1421 = vsub.f32 1.0, %v1070
    %v1422 = vsub.f32 1.0, %v1074
    %v1423 = vsub.f32 1.0, %v1078
    %v1424 = vsub.f32 1.0, %v1082
    %v1425 = vmul.f32 %v1421, %v1417
    %v1426 = vmul.f32 %v1422, %v1418
    %v1427 = vmul.f32 %v1423, %v1419
    %v1428 = vmul.f32 %v1424, %v1420
    %v1429 = vmul.f32 %v1070, %v84
    %v1430 = vmul.f32 %v1074, %v85
    %v1431 = vmul.f32 %v1078, %v86
    %v1432 = vmul.f32 %v1082, %v87
    %v1433 = vadd.f32 %v1425, %v1429
    %v1434 = vadd.f32 %v1426, %v1430
    %v1435 = vadd.f32 %v1427, %v1431
    %v1436 = vadd.f32 %v1428, %v1432
    %1437 = vst [vmem:[#allocation10] sm:$0xff] %v1433
    %1438 = vst [vmem:[#allocation10 + $0x8] sm:$0xff] %v1434
    %1439 = vst [vmem:[#allocation10 + $0x10] sm:$0xff] %v1435
    %1440 = vst [vmem:[#allocation10 + $0x18] sm:$0xff] %v1436
    // Predicated region
    $region42: #{tpu_custom_call.1} parent=1 // pred_check
      _
    $region43: #{tpu_custom_call.1} parent=1 // pred_check_branch
      %1442 = sbr.rel (0) target = $region45
    $region44: #{tpu_custom_call.1} parent=1 // pred_region
      %s1444 = ssub.s32 512, 512
      %1445 = vsyncadd [#allocation4], %s1444
      %s1446 = sshll.u32 [#allocation10], 4
      %s1447 = int_to_ptr.vmem [resolvable:$true] %s1446
      %1452 = dma.vmem_to_hbm [thread:$0]  %s1447, 512, %s6, [#allocation4], 128, 128, 8
    $region45: #{tpu_custom_call.1} parent=1 // pred_fallthru
      _
    // Predicated region
    $region46: #{tpu_custom_call.1} parent=1 // pred_check
      _
    $region47: #{tpu_custom_call.1} parent=1 // pred_check_branch
      %1454 = sbr.rel (0) target = $region49
    $region48: #{tpu_custom_call.1} parent=1 // pred_region
      %1455 = dma.done [#allocation4], 512
    $region49: #{tpu_custom_call.1} parent=1 // pred_fallthru
      _
    %1456 = vsyncpa [#allocation3], 1
    %1457 = vsyncpa [#allocation6], 1
    %1458 = vsyncpa [#allocation9], 1
    %1459 = vsyncpa [#allocation4], 1

</llo_original>
